<compile_context>
chip_gen: v7x
topology: tpu7x:2x2x1
jax: 0.10.0
libtpu: 0.0.40
codegen_flags: <defaults>
</compile_context>

<pallas_src>
import functools
import math

import jax
import jax.numpy as jnp
from jax.experimental import pallas as pl
from jax.experimental.pallas import tpu as pltpu


def _seq_mlp_kernel(x_ref, w1_ref, b1_ref, w2_ref, b2_ref, o_ref, *, compute_dtype):
    # Layer 0: Linear(in -> hidden). bf16 (or f32) operands, f32 accumulation on the MXU.
    x = x_ref[...].astype(compute_dtype)
    h = jnp.dot(x, w1_ref[...], preferred_element_type=jnp.float32)
    h = h + b1_ref[...]                      # (1, Dh) bias broadcasts over the batch tile
    # Layer 1: ReLU (f32, VPU — co-issues under the MXU, keep it in-kernel).
    h = jnp.maximum(h, 0.0)
    # Layer 2: Linear(hidden -> out).  h is tile_b x Dh f32 (128KB in the demo) — small
    # enough to stay live; for very large Dh, chunk Dh via a VMEM scratch instead of
    # shrinking tile_b.
    y = jnp.dot(h.astype(compute_dtype), w2_ref[...], preferred_element_type=jnp.float32)
    y = y + b2_ref[...]
    # Layer 3: Tanh (f32, EUP) then cast to output dtype (lane-dense full vst).
    o_ref[...] = jnp.tanh(y).astype(o_ref.dtype)


def sequential_forward(x, w1, b1, w2, b2, *, tile_b=128, compute_dtype=jnp.bfloat16):
    """Fused Sequential(Linear, ReLU, Linear, Tanh) forward as one pallas_call."""
    B, Din = x.shape
    Dh = w1.shape[1]
    Dout = w2.shape[1]

    # Weights are streamed in the matmul compute dtype (halves DMA bytes + VMEM
    # footprint when bf16); biases stay f32 for the elementwise epilogue.
    w1c = w1.astype(compute_dtype)
    w2c = w2.astype(compute_dtype)
    b1c = b1.astype(jnp.float32)
    b2c = b2.astype(jnp.float32)

    # Ragged batches: zero-pad to a multiple of tile_b, slice the result back.
    Bp = tile_b * pl.cdiv(B, tile_b)
    x_p = x if Bp == B else jnp.pad(x, ((0, Bp - B), (0, 0)))

    grid = (Bp // tile_b,)
    kernel = functools.partial(_seq_mlp_kernel, compute_dtype=compute_dtype)

    w_item = jnp.dtype(compute_dtype).itemsize
    cost = pl.CostEstimate(
        flops=2 * Bp * Din * Dh + 2 * Bp * Dh * Dout,
        transcendentals=Bp * Dout,
        bytes_accessed=(x_p.size * x_p.dtype.itemsize
                        + (w1c.size + w2c.size) * w_item
                        + (b1c.size + b2c.size) * 4
                        + Bp * Dout * x.dtype.itemsize),
    )

    def make_call(single_buffer_weights):
        # Weights/biases have a constant index_map; single-buffering them halves
        # their VMEM footprint at zero cost.
        const_kwargs = dict(pipeline_mode=pl.Buffered(1)) if single_buffer_weights else {}
        in_specs = [
            pl.BlockSpec((tile_b, Din), lambda i: (i, 0)),               # x tile
            pl.BlockSpec((Din, Dh), lambda i: (0, 0), **const_kwargs),   # W1 (whole)
            pl.BlockSpec((1, Dh), lambda i: (0, 0), **const_kwargs),     # b1
            pl.BlockSpec((Dh, Dout), lambda i: (0, 0), **const_kwargs),  # W2 (whole)
            pl.BlockSpec((1, Dout), lambda i: (0, 0), **const_kwargs),   # b2
        ]
        return pl.pallas_call(
            kernel,
            out_shape=jax.ShapeDtypeStruct((Bp, Dout), x.dtype),
            grid_spec=pltpu.PrefetchScalarGridSpec(
                num_scalar_prefetch=0,
                grid=grid,
                in_specs=in_specs,
                out_specs=pl.BlockSpec((tile_b, Dout), lambda i: (i, 0)),
            ),
            compiler_params=pltpu.CompilerParams(
                # Batch axis is embarrassingly parallel -> shards across v7x's 2 TCs
                # when the grid has >=2 steps.
                dimension_semantics=("parallel",),
                # Raise the scoped VMEM limit above the 16/32 MiB defaults; re-derive
                # per generation (128/128/64 MiB physical on v5e/v6e/v7x).
                vmem_limit_bytes=64 * 1024 * 1024,
            ),
            cost_estimate=cost,
        )

    try:
        out = make_call(True)(x_p, w1c, b1c, w2c, b2c)
    except Exception:
        # Fallback for environments where per-BlockSpec buffer counts are not
        # supported by the pallas_call pipeliner (weights then double-buffered).
        out = make_call(False)(x_p, w1c, b1c, w2c, b2c)
    return out[:B]


def sequential_forward_ref(x, w1, b1, w2, b2, compute_dtype=jnp.float32):
    """Pure-JAX reference of the same Sequential forward (matching matmul dtype)."""
    h = jnp.dot(x.astype(compute_dtype), w1.astype(compute_dtype),
                preferred_element_type=jnp.float32) + b1
    h = jnp.maximum(h, 0.0)
    y = jnp.dot(h.astype(compute_dtype), w2.astype(compute_dtype),
                preferred_element_type=jnp.float32) + b2
    return jnp.tanh(y)


if __name__ == "__main__":
    # Deterministic parameter init (PyTorch-Linear-style uniform bounds).
    key = jax.random.PRNGKey(0)
    k_x, k_w1, k_b1, k_w2, k_b2 = jax.random.split(key, 5)

    # Lane-dense shapes (multiples of 128) and tile_b=128 per the performance review;
    # grid = (2,) so both v7x TensorCores get work.  Still tiny and instant to run.
    B, Din, Dh, Dout = 256, 128, 256, 128
    tile_b = 128

    bound1 = 1.0 / math.sqrt(Din)
    bound2 = 1.0 / math.sqrt(Dh)

    x = jax.random.normal(k_x, (B, Din), dtype=jnp.float32)
    w1 = jax.random.uniform(k_w1, (Din, Dh), minval=-bound1, maxval=bound1, dtype=jnp.float32)
    b1 = jax.random.uniform(k_b1, (1, Dh), minval=-bound1, maxval=bound1, dtype=jnp.float32)
    w2 = jax.random.uniform(k_w2, (Dh, Dout), minval=-bound2, maxval=bound2, dtype=jnp.float32)
    b2 = jax.random.uniform(k_b2, (1, Dout), minval=-bound2, maxval=bound2, dtype=jnp.float32)

    out = sequential_forward(x, w1, b1, w2, b2, tile_b=tile_b, compute_dtype=jnp.bfloat16)
    out = jax.block_until_ready(out)
    assert out.shape == (B, Dout)

    # Tight check against a reference using the same bf16-matmul / f32-accumulate numerics.
    ref_bf16 = sequential_forward_ref(x, w1, b1, w2, b2, compute_dtype=jnp.bfloat16)
    assert jnp.allclose(out, ref_bf16, atol=2e-3, rtol=2e-3), "mismatch vs bf16-matmul reference"

    # Sanity check against the full-f32 module semantics (looser: bf16 matmul rounding).
    ref_f32 = sequential_forward_ref(x, w1, b1, w2, b2, compute_dtype=jnp.float32)
    assert jnp.allclose(out, ref_f32, atol=5e-2, rtol=5e-2), "mismatch vs f32 reference"

    # TODO(synk): Sequential.backward / parameters() / zero_grad / save / load are
    # host-side container glue with no kernel equivalent; only forward is implemented.
    print("KERNEL_OK")
</pallas_src>

<mosaic_0001>
module attributes {stable_mosaic.version = 11 : i64} {
  func.func @_seq_mlp_kernel(%arg0: i32, %arg1: memref<128x128xf32, #tpu.memory_space<vmem>>, %arg2: memref<128x256xbf16, #tpu.memory_space<vmem>>, %arg3: memref<1x256xf32, #tpu.memory_space<vmem>>, %arg4: memref<256x128xbf16, #tpu.memory_space<vmem>>, %arg5: memref<1x128xf32, #tpu.memory_space<vmem>>, %arg6: memref<128x128xf32, #tpu.memory_space<vmem>>) attributes {dimension_semantics = [#tpu.dimension_semantics<parallel>], iteration_bounds = array<i64: 2>, scalar_prefetch = 0 : i64, scratch_operands = 0 : i64, tpu.core_type = #tpu.core_type<tc>, window_params = [{transform_indices = @transform_0, window_bounds = array<i64: 128, 128>}, {pipeline_mode = #tpu.pipeline_mode<synchronous>, transform_indices = @transform_1, window_bounds = array<i64: 128, 256>}, {pipeline_mode = #tpu.pipeline_mode<synchronous>, transform_indices = @transform_2, window_bounds = array<i64: 1, 256>}, {pipeline_mode = #tpu.pipeline_mode<synchronous>, transform_indices = @transform_3, window_bounds = array<i64: 256, 128>}, {pipeline_mode = #tpu.pipeline_mode<synchronous>, transform_indices = @transform_4, window_bounds = array<i64: 1, 128>}, {transform_indices = @transform_5, window_bounds = array<i64: 128, 128>}]} {
    %c0 = arith.constant 0 : index
    %c0_0 = arith.constant 0 : index
    %0 = vector.load %arg1[%c0, %c0_0] : memref<128x128xf32, #tpu.memory_space<vmem>>, vector<128x128xf32>
    %1 = arith.truncf %0 : vector<128x128xf32> to vector<128x128xbf16>
    %c0_1 = arith.constant 0 : index
    %c0_2 = arith.constant 0 : index
    %2 = vector.load %arg2[%c0_1, %c0_2] : memref<128x256xbf16, #tpu.memory_space<vmem>>, vector<128x256xbf16>
    %cst = arith.constant dense<0.000000e+00> : vector<128x256xf32>
    %3 = tpu.matmul %1, %2, %cst {dimension_numbers = #tpu.dot_dimension_numbers<[1], [0], [0], [1], [0, 0, 1, 1], [], []>} : vector<128x128xbf16>, vector<128x256xbf16>, vector<128x256xf32> -> vector<128x256xf32>
    %c0_3 = arith.constant 0 : index
    %c0_4 = arith.constant 0 : index
    %4 = vector.load %arg3[%c0_3, %c0_4] : memref<1x256xf32, #tpu.memory_space<vmem>>, vector<1x256xf32>
    %5 = vector.broadcast %4 : vector<1x256xf32> to vector<128x256xf32>
    %6 = arith.addf %3, %5 : vector<128x256xf32>
    %cst_5 = arith.constant 0.000000e+00 : f32
    %7 = vector.broadcast %cst_5 : f32 to vector<128x256xf32>
    %8 = arith.maximumf %6, %7 : vector<128x256xf32>
    %9 = arith.truncf %8 : vector<128x256xf32> to vector<128x256xbf16>
    %c0_6 = arith.constant 0 : index
    %c0_7 = arith.constant 0 : index
    %10 = vector.load %arg4[%c0_6, %c0_7] : memref<256x128xbf16, #tpu.memory_space<vmem>>, vector<256x128xbf16>
    %cst_8 = arith.constant dense<0.000000e+00> : vector<128x128xf32>
    %11 = tpu.matmul %9, %10, %cst_8 {dimension_numbers = #tpu.dot_dimension_numbers<[1], [0], [0], [1], [0, 0, 1, 1], [], []>} : vector<128x256xbf16>, vector<256x128xbf16>, vector<128x128xf32> -> vector<128x128xf32>
    %c0_9 = arith.constant 0 : index
    %c0_10 = arith.constant 0 : index
    %12 = vector.load %arg5[%c0_9, %c0_10] : memref<1x128xf32, #tpu.memory_space<vmem>>, vector<1x128xf32>
    %13 = vector.broadcast %12 : vector<1x128xf32> to vector<128x128xf32>
    %14 = arith.addf %11, %13 : vector<128x128xf32>
    %15 = math.tanh %14 : vector<128x128xf32>
    %c0_11 = arith.constant 0 : index
    %c0_12 = arith.constant 0 : index
    %16 = vector.load %arg6[%c0_11, %c0_12] : memref<128x128xf32, #tpu.memory_space<vmem>>, vector<128x128xf32>
    tpu.vector_store %arg6[%c0_11, %c0_12], %15 {strides = array<i32>} : memref<128x128xf32, #tpu.memory_space<vmem>>, vector<128x128xf32>,
    return
  }
  func.func @transform_0(%arg0: i32) -> (i32, i32) {
    %c0_i32 = arith.constant 0 : i32
    %c0_i32_0 = arith.constant 0 : i32
    return %arg0, %c0_i32 : i32, i32
  }
  func.func @transform_1(%arg0: i32) -> (i32, i32) {
    %c0_i32 = arith.constant 0 : i32
    %c0_i32_0 = arith.constant 0 : i32
    %c0_i32_1 = arith.constant 0 : i32
    return %c0_i32, %c0_i32_0 : i32, i32
  }
  func.func @transform_2(%arg0: i32) -> (i32, i32) {
    %c0_i32 = arith.constant 0 : i32
    %c0_i32_0 = arith.constant 0 : i32
    %c0_i32_1 = arith.constant 0 : i32
    return %c0_i32, %c0_i32_0 : i32, i32
  }
  func.func @transform_3(%arg0: i32) -> (i32, i32) {
    %c0_i32 = arith.constant 0 : i32
    %c0_i32_0 = arith.constant 0 : i32
    %c0_i32_1 = arith.constant 0 : i32
    return %c0_i32, %c0_i32_0 : i32, i32
  }
  func.func @transform_4(%arg0: i32) -> (i32, i32) {
    %c0_i32 = arith.constant 0 : i32
    %c0_i32_0 = arith.constant 0 : i32
    %c0_i32_1 = arith.constant 0 : i32
    return %c0_i32, %c0_i32_0 : i32, i32
  }
  func.func @transform_5(%arg0: i32) -> (i32, i32) {
    %c0_i32 = arith.constant 0 : i32
    %c0_i32_0 = arith.constant 0 : i32
    return %arg0, %c0_i32 : i32, i32
  }
}

module attributes {stable_mosaic.version = 11 : i64} {
  func.func @_seq_mlp_kernel(%arg0: i32, %arg1: memref<128x128xf32, #tpu.memory_space<vmem>>, %arg2: memref<128x256xbf16, #tpu.memory_space<vmem>>, %arg3: memref<1x256xf32, #tpu.memory_space<vmem>>, %arg4: memref<256x128xbf16, #tpu.memory_space<vmem>>, %arg5: memref<1x128xf32, #tpu.memory_space<vmem>>, %arg6: memref<128x128xf32, #tpu.memory_space<vmem>>) attributes {dimension_semantics = [#tpu.dimension_semantics<parallel>], iteration_bounds = array<i64: 2>, scalar_prefetch = 0 : i64, scratch_operands = 0 : i64, tpu.core_type = #tpu.core_type<tc>, window_params = [{transform_indices = @transform_0, window_bounds = array<i64: 128, 128>}, {pipeline_mode = #tpu.pipeline_mode<synchronous>, transform_indices = @transform_1, window_bounds = array<i64: 128, 256>}, {pipeline_mode = #tpu.pipeline_mode<synchronous>, transform_indices = @transform_2, window_bounds = array<i64: 1, 256>}, {pipeline_mode = #tpu.pipeline_mode<synchronous>, transform_indices = @transform_3, window_bounds = array<i64: 256, 128>}, {pipeline_mode = #tpu.pipeline_mode<synchronous>, transform_indices = @transform_4, window_bounds = array<i64: 1, 128>}, {transform_indices = @transform_5, window_bounds = array<i64: 128, 128>}]} {
    %c0 = arith.constant 0 : index
    %c0_0 = arith.constant 0 : index
    %0 = vector.load %arg1[%c0, %c0_0] : memref<128x128xf32, #tpu.memory_space<vmem>>, vector<128x128xf32>
    %1 = arith.truncf %0 : vector<128x128xf32> to vector<128x128xbf16>
    %c0_1 = arith.constant 0 : index
    %c0_2 = arith.constant 0 : index
    %2 = vector.load %arg2[%c0_1, %c0_2] : memref<128x256xbf16, #tpu.memory_space<vmem>>, vector<128x256xbf16>
    %cst = arith.constant dense<0.000000e+00> : vector<128x256xf32>
    %3 = tpu.matmul %1, %2, %cst {dimension_numbers = #tpu.dot_dimension_numbers<[1], [0], [0], [1], [0, 0, 1, 1], [], []>} : vector<128x128xbf16>, vector<128x256xbf16>, vector<128x256xf32> -> vector<128x256xf32>
    %c0_3 = arith.constant 0 : index
    %c0_4 = arith.constant 0 : index
    %4 = vector.load %arg3[%c0_3, %c0_4] : memref<1x256xf32, #tpu.memory_space<vmem>>, vector<1x256xf32>
    %5 = vector.broadcast %4 : vector<1x256xf32> to vector<128x256xf32>
    %6 = arith.addf %3, %5 : vector<128x256xf32>
    %cst_5 = arith.constant 0.000000e+00 : f32
    %7 = vector.broadcast %cst_5 : f32 to vector<128x256xf32>
    %8 = arith.maximumf %6, %7 : vector<128x256xf32>
    %9 = arith.truncf %8 : vector<128x256xf32> to vector<128x256xbf16>
    %c0_6 = arith.constant 0 : index
    %c0_7 = arith.constant 0 : index
    %10 = vector.load %arg4[%c0_6, %c0_7] : memref<256x128xbf16, #tpu.memory_space<vmem>>, vector<256x128xbf16>
    %cst_8 = arith.constant dense<0.000000e+00> : vector<128x128xf32>
    %11 = tpu.matmul %9, %10, %cst_8 {dimension_numbers = #tpu.dot_dimension_numbers<[1], [0], [0], [1], [0, 0, 1, 1], [], []>} : vector<128x256xbf16>, vector<256x128xbf16>, vector<128x128xf32> -> vector<128x128xf32>
    %c0_9 = arith.constant 0 : index
    %c0_10 = arith.constant 0 : index
    %12 = vector.load %arg5[%c0_9, %c0_10] : memref<1x128xf32, #tpu.memory_space<vmem>>, vector<1x128xf32>
    %13 = vector.broadcast %12 : vector<1x128xf32> to vector<128x128xf32>
    %14 = arith.addf %11, %13 : vector<128x128xf32>
    %15 = math.tanh %14 : vector<128x128xf32>
    %c0_11 = arith.constant 0 : index
    %c0_12 = arith.constant 0 : index
    %16 = vector.load %arg6[%c0_11, %c0_12] : memref<128x128xf32, #tpu.memory_space<vmem>>, vector<128x128xf32>
    tpu.vector_store %arg6[%c0_11, %c0_12], %15 {strides = array<i32>} : memref<128x128xf32, #tpu.memory_space<vmem>>, vector<128x128xf32>,
    return
  }
  func.func @transform_0(%arg0: i32) -> (i32, i32) {
    %c0_i32 = arith.constant 0 : i32
    %c0_i32_0 = arith.constant 0 : i32
    return %arg0, %c0_i32 : i32, i32
  }
  func.func @transform_1(%arg0: i32) -> (i32, i32) {
    %c0_i32 = arith.constant 0 : i32
    %c0_i32_0 = arith.constant 0 : i32
    %c0_i32_1 = arith.constant 0 : i32
    return %c0_i32, %c0_i32_0 : i32, i32
  }
  func.func @transform_2(%arg0: i32) -> (i32, i32) {
    %c0_i32 = arith.constant 0 : i32
    %c0_i32_0 = arith.constant 0 : i32
    %c0_i32_1 = arith.constant 0 : i32
    return %c0_i32, %c0_i32_0 : i32, i32
  }
  func.func @transform_3(%arg0: i32) -> (i32, i32) {
    %c0_i32 = arith.constant 0 : i32
    %c0_i32_0 = arith.constant 0 : i32
    %c0_i32_1 = arith.constant 0 : i32
    return %c0_i32, %c0_i32_0 : i32, i32
  }
  func.func @transform_4(%arg0: i32) -> (i32, i32) {
    %c0_i32 = arith.constant 0 : i32
    %c0_i32_0 = arith.constant 0 : i32
    %c0_i32_1 = arith.constant 0 : i32
    return %c0_i32, %c0_i32_0 : i32, i32
  }
  func.func @transform_5(%arg0: i32) -> (i32, i32) {
    %c0_i32 = arith.constant 0 : i32
    %c0_i32_0 = arith.constant 0 : i32
    return %arg0, %c0_i32 : i32, i32
  }
}

</mosaic_0001>

<llo_original>
// kernel: tpu_custom_call.1
$region0: #{tpu_custom_call.1}
  #allocation0 [shape = 'u32[]', space=smem, size = 0x4, offset = 0x4, fixed_abs, tag = 'smem constant byte address 0x4 - core index']
  #allocation1 [shape = 'u32[144,128]{1,0:T(1,128)}', space=vmem, size = 0x12000, scoped, tag = 'internal scratch']
  %s0 = inlined_call_operand.hbm [shape: f32[256,128], index: 0, kind: input, shape index: {}]
  %s1 = inlined_call_operand.hbm [shape: bf16[128,256], index: 1, kind: input, shape index: {}]
  %s2 = inlined_call_operand.hbm [shape: f32[1,256], index: 2, kind: input, shape index: {}]
  %s3 = inlined_call_operand.hbm [shape: bf16[256,128], index: 3, kind: input, shape index: {}]
  %s4 = inlined_call_operand.hbm [shape: f32[1,128], index: 4, kind: input, shape index: {}]
  %s5 = inlined_call_operand.hbm [shape: f32[256,128], index: 5, kind: output, shape index: {}]
  %s6 = sld [smem:[#allocation0]]
  $region73: #{tpu_custom_call.1} parent=0
    _
  %s8 = ssub.s32 1, %s6
  %s9 = scalar_select 0, %s8, %s6
  $region1: #{tpu_custom_call.1} parent=0
    #allocation2 [shape = 'u8[131072]{0}', space=vmem, size = 0x20000, scoped, tag = 'input window, operand 0']
    #allocation3 [shape = 's32[2]{0}', space=sflag, size = 0x8, scoped, tag = 'scoped memory for tpu_custom_call.1']
    #allocation4 [shape = 's32[2]{0}', space=sflag, size = 0x8, scoped, tag = 'scoped memory for tpu_custom_call.1']
    #allocation5 [shape = 'u8[65536]{0}', space=vmem, size = 0x10000, scoped, tag = 'input window, operand 1, single buffered']
    #allocation6 [shape = 's32[1]{0}', space=sflag, size = 0x4, scoped, tag = 'scoped memory for tpu_custom_call.1']
    #allocation7 [shape = 'u8[1024]{0}', space=vmem, size = 0x400, scoped, tag = 'input window, operand 2, single buffered']
    #allocation8 [shape = 'u8[65536]{0}', space=vmem, size = 0x10000, scoped, tag = 'input window, operand 3, single buffered']
    #allocation9 [shape = 's32[1]{0}', space=sflag, size = 0x4, scoped, tag = 'scoped memory for tpu_custom_call.1']
    #allocation10 [shape = 'u8[512]{0}', space=vmem, size = 0x400, scoped, tag = 'input window, operand 4, single buffered']
    #allocation11 [shape = 'u8[131072]{0}', space=vmem, size = 0x20000, scoped, tag = 'output window, operand 0']
    %10 = vsyncpa [#allocation3], 0
    %s11 = scalar_lea.sflag [#allocation3], 1
    %12 = vsyncpa %s11, 0
    %13 = vsyncpa [#allocation6], 0
    %14 = vsyncpa [#allocation9], 0
    %15 = vsyncpa [#allocation4], 0
    %s16 = scalar_lea.sflag [#allocation4], 1
    %17 = vsyncpa %s16, 0
    loop: start=0, step=1, limit=4
    $region2: #{tpu_custom_call.1} parent=1 // loop_pre_header
      _
    $region3: #{tpu_custom_call.1} parent=1 // loop_header
      %s19 = sphi 0, %s23
      %p20 = scmp.ge.s32.totalorder %s19, 4
      %s29 = sphi 0, %s31
      %s32 = sphi 0, %s29
      %s33 = sphi 0, %s32
      %s49 = sphi 0, %s33
      %s53 = sphi 0, %s53
      %s55 = sphi 0, %s53
      %s56 = sphi 0, %s55
      %s70 = sphi 0, %s56
      %s74 = sphi 0, %s74
      %s76 = sphi 0, %s74
      %s77 = sphi 0, %s76
      %s91 = sphi 0, %s77
      %s95 = sphi 0, %s95
      %s97 = sphi 0, %s95
      %s98 = sphi 0, %s97
      %s112 = sphi 0, %s98
      %s116 = sphi 0, %s116
      %s118 = sphi 0, %s116
      %s119 = sphi 0, %s118
      %s133 = sphi 0, %s119
      %s139 = sphi 0, %s141
      %s142 = sphi 0, %s139
      %s143 = sphi 0, %s142
      %s159 = sphi 0, %s143
    $region4: #{tpu_custom_call.1} parent=1 // loop_header_branch
      %22 = sbr.rel (%p20) target = $region8
    $region5: #{tpu_custom_call.1} parent=1 // loop_body
      %s24 = ssub.s32 %s19, 1
      %s25 = ssub.s32 %s19, 2
      %s26 = sadd.s32 %s19, 1
      %s27 = ssub.s32 %s19, %s26
      %p28 = scmp.eq.s32.totalorder %s27, 0
      %s30 = sadd.s32 %s29, 1
      %s31 = scalar_select %p28, %s29, %s30
      %p34 = pneg %p28
      %p35 = scmp.eq.s32.totalorder %s19, 1
      %p36 = por %p34, %p35
      %p37 = scmp.ne.s32.totalorder %s29, %s32
      %p38 = scmp.eq.s32.totalorder %s19, 0
      %p39 = por %p37, %p38
      %p40 = scmp.ne.s32.totalorder %s29, %s32
      %p41 = scmp.eq.s32.totalorder %s24, 1
      %p42 = por %p40, %p41
      %p43 = scmp.ne.s32.totalorder %s32, %s33
      %p44 = scmp.eq.s32.totalorder %s24, 0
      %p45 = por %p43, %p44
      %p46 = scmp.ne.s32.totalorder %s32, %s33
      %p47 = scmp.eq.s32.totalorder %s25, 1
      %p48 = por %p46, %p47
      %p50 = scmp.ne.s32.totalorder %s33, %s49
      %p51 = scmp.eq.s32.totalorder %s25, 0
      %p52 = por %p50, %p51
      %s54 = sadd.s32 %s53, 1
      %p57 = scmp.eq.s32.totalorder %s19, 1
      %p58 = scmp.ne.s32.totalorder %s53, %s55
      %p59 = scmp.eq.s32.totalorder %s19, 0
      %p60 = por %p58, %p59
      %p61 = scmp.ne.s32.totalorder %s53, %s55
      %p62 = scmp.eq.s32.totalorder %s24, 1
      %p63 = por %p61, %p62
      %p64 = scmp.ne.s32.totalorder %s55, %s56
      %p65 = scmp.eq.s32.totalorder %s24, 0
      %p66 = por %p64, %p65
      %p67 = scmp.ne.s32.totalorder %s55, %s56
      %p68 = scmp.eq.s32.totalorder %s25, 1
      %p69 = por %p67, %p68
      %p71 = scmp.ne.s32.totalorder %s56, %s70
      %p72 = scmp.eq.s32.totalorder %s25, 0
      %p73 = por %p71, %p72
      %s75 = sadd.s32 %s74, 1
      %p78 = scmp.eq.s32.totalorder %s19, 1
      %p79 = scmp.ne.s32.totalorder %s74, %s76
      %p80 = scmp.eq.s32.totalorder %s19, 0
      %p81 = por %p79, %p80
      %p82 = scmp.ne.s32.totalorder %s74, %s76
      %p83 = scmp.eq.s32.totalorder %s24, 1
      %p84 = por %p82, %p83
      %p85 = scmp.ne.s32.totalorder %s76, %s77
      %p86 = scmp.eq.s32.totalorder %s24, 0
      %p87 = por %p85, %p86
      %p88 = scmp.ne.s32.totalorder %s76, %s77
      %p89 = scmp.eq.s32.totalorder %s25, 1
      %p90 = por %p88, %p89
      %p92 = scmp.ne.s32.totalorder %s77, %s91
      %p93 = scmp.eq.s32.totalorder %s25, 0
      %p94 = por %p92, %p93
      %s96 = sadd.s32 %s95, 1
      %p99 = scmp.eq.s32.totalorder %s19, 1
      %p100 = scmp.ne.s32.totalorder %s95, %s97
      %p101 = scmp.eq.s32.totalorder %s19, 0
      %p102 = por %p100, %p101
      %p103 = scmp.ne.s32.totalorder %s95, %s97
      %p104 = scmp.eq.s32.totalorder %s24, 1
      %p105 = por %p103, %p104
      %p106 = scmp.ne.s32.totalorder %s97, %s98
      %p107 = scmp.eq.s32.totalorder %s24, 0
      %p108 = por %p106, %p107
      %p109 = scmp.ne.s32.totalorder %s97, %s98
      %p110 = scmp.eq.s32.totalorder %s25, 1
      %p111 = por %p109, %p110
      %p113 = scmp.ne.s32.totalorder %s98, %s112
      %p114 = scmp.eq.s32.totalorder %s25, 0
      %p115 = por %p113, %p114
      %s117 = sadd.s32 %s116, 1
      %p120 = scmp.eq.s32.totalorder %s19, 1
      %p121 = scmp.ne.s32.totalorder %s116, %s118
      %p122 = scmp.eq.s32.totalorder %s19, 0
      %p123 = por %p121, %p122
      %p124 = scmp.ne.s32.totalorder %s116, %s118
      %p125 = scmp.eq.s32.totalorder %s24, 1
      %p126 = por %p124, %p125
      %p127 = scmp.ne.s32.totalorder %s118, %s119
      %p128 = scmp.eq.s32.totalorder %s24, 0
      %p129 = por %p127, %p128
      %p130 = scmp.ne.s32.totalorder %s118, %s119
      %p131 = scmp.eq.s32.totalorder %s25, 1
      %p132 = por %p130, %p131
      %p134 = scmp.ne.s32.totalorder %s119, %s133
      %p135 = scmp.eq.s32.totalorder %s25, 0
      %p136 = por %p134, %p135
      %s137 = ssub.s32 %s19, %s26
      %p138 = scmp.eq.s32.totalorder %s137, 0
      %s140 = sadd.s32 %s139, 1
      %s141 = scalar_select %p138, %s139, %s140
      %p144 = pneg %p138
      %p145 = scmp.eq.s32.totalorder %s19, 1
      %p146 = por %p144, %p145
      %p147 = scmp.ne.s32.totalorder %s139, %s142
      %p148 = scmp.eq.s32.totalorder %s19, 0
      %p149 = por %p147, %p148
      %p150 = scmp.ne.s32.totalorder %s139, %s142
      %p151 = scmp.eq.s32.totalorder %s24, 1
      %p152 = por %p150, %p151
      %p153 = scmp.ne.s32.totalorder %s142, %s143
      %p154 = scmp.eq.s32.totalorder %s24, 0
      %p155 = por %p153, %p154
      %p156 = scmp.ne.s32.totalorder %s142, %s143
      %p157 = scmp.eq.s32.totalorder %s25, 1
      %p158 = por %p156, %p157
      %p160 = scmp.ne.s32.totalorder %s143, %s159
      %p161 = scmp.eq.s32.totalorder %s25, 0
      %p162 = por %p160, %p161
      %p163 = scmp.le.s32.totalorder 1, %s19
      %p164 = scmp.lt.s32.totalorder %s19, 3
      %p165 = pnand %p163, %p164
      %p166 = pneg %p165
      // Predicated region
      $region9: #{tpu_custom_call.1} parent=5 // pred_check
        _
      $region10: #{tpu_custom_call.1} parent=5 // pred_check_branch
        %168 = sbr.rel (%p165) target = $region12
      $region11: #{tpu_custom_call.1} parent=5 // pred_region
        %s169 = ssub.s32 %s19, 1
        // Predicated region
        $region13: #{tpu_custom_call.1} parent=11 // pred_check
          %p170 = pneg %p66
        $region14: #{tpu_custom_call.1} parent=11 // pred_check_branch
          %172 = sbr.rel (%p170) target = $region16
        $region15: #{tpu_custom_call.1} parent=11 // pred_region
          %s174 = ssub.s32 2048, 2048
          %175 = vsyncadd [#allocation6], %s174
          %s176 = sshll.u32 [#allocation5], 4
          %s177 = int_to_ptr.vmem [resolvable:$true] %s176
          %182 = dma.hbm_to_vmem [thread:$0]  %s1, 2048, %s177, [#allocation6], 128, 128, 8
        $region16: #{tpu_custom_call.1} parent=11 // pred_fallthru
          _
        // Predicated region
        $region17: #{tpu_custom_call.1} parent=11 // pred_check
          %p183 = pneg %p87
        $region18: #{tpu_custom_call.1} parent=11 // pred_check_branch
          %185 = sbr.rel (%p183) target = $region20
        $region19: #{tpu_custom_call.1} parent=11 // pred_region
          %s187 = ssub.s32 32, 32
          %188 = vsyncadd [#allocation6], %s187
          %s190 = sshll.u32 [#allocation7], 4
          %s191 = int_to_ptr.vmem [resolvable:$true] %s190
          %193 = dma.hbm_to_vmem [thread:$0]  %s2, 32, %s191, [#allocation6]
        $region20: #{tpu_custom_call.1} parent=11 // pred_fallthru
          _
        // Predicated region
        $region21: #{tpu_custom_call.1} parent=11 // pred_check
          %p194 = pneg %p108
        $region22: #{tpu_custom_call.1} parent=11 // pred_check_branch
          %196 = sbr.rel (%p194) target = $region24
        $region23: #{tpu_custom_call.1} parent=11 // pred_region
          %s198 = ssub.s32 2048, 2048
          %199 = vsyncadd [#allocation9], %s198
          %s200 = sshll.u32 [#allocation8], 4
          %s201 = int_to_ptr.vmem [resolvable:$true] %s200
          %206 = dma.hbm_to_vmem [thread:$0]  %s3, 2048, %s201, [#allocation9], 64, 64, 4
        $region24: #{tpu_custom_call.1} parent=11 // pred_fallthru
          _
        // Predicated region
        $region25: #{tpu_custom_call.1} parent=11 // pred_check
          %p207 = pneg %p129
        $region26: #{tpu_custom_call.1} parent=11 // pred_check_branch
          %209 = sbr.rel (%p207) target = $region28
        $region27: #{tpu_custom_call.1} parent=11 // pred_region
          %s211 = ssub.s32 16, 16
          %212 = vsyncadd [#allocation9], %s211
          %s214 = sshll.u32 [#allocation10], 4
          %s215 = int_to_ptr.vmem [resolvable:$true] %s214
          %217 = dma.hbm_to_vmem [thread:$0]  %s4, 16, %s215, [#allocation9]
        $region28: #{tpu_custom_call.1} parent=11 // pred_fallthru
          _
      $region12: #{tpu_custom_call.1} parent=5 // pred_fallthru
        _
      %p218 = scmp.lt.s32.totalorder %s19, 2
      // Predicated region
      $region29: #{tpu_custom_call.1} parent=5 // pred_check
        %p219 = pneg %p218
      $region30: #{tpu_custom_call.1} parent=5 // pred_check_branch
        %221 = sbr.rel (%p219) target = $region32
      $region31: #{tpu_custom_call.1} parent=5 // pred_region
        // Predicated region
        $region33: #{tpu_custom_call.1} parent=31 // pred_check
          %p222 = pneg %p39
        $region34: #{tpu_custom_call.1} parent=31 // pred_check_branch
          %224 = sbr.rel (%p222) target = $region36
        $region35: #{tpu_custom_call.1} parent=31 // pred_region
          %s225 = sand.u32 %s29, 1
          %s226 = scalar_lea.sflag [#allocation3], %s225
          %s227 = sand.u32 %s29, 1
          %s228 = smul.addr %s227, 128
          %s229 = scalar_lea.vmem [#allocation2], %s228
          %s230 = smul.u32 16, %s19
          %s232 = ssub.s32 2048, 2048
          %233 = vsyncadd %s226, %s232
          %s234 = smul.addr %s230, 128
          %s235 = scalar_lea.hbm %s0, %s234
          %s236 = sshll.u32 %s229, 4
          %s237 = int_to_ptr.vmem [resolvable:$true] %s236
          %242 = dma.hbm_to_vmem [thread:$0]  %s235, 2048, %s237, %s226, 128, 128, 8
        $region36: #{tpu_custom_call.1} parent=31 // pred_fallthru
          _
      $region32: #{tpu_custom_call.1} parent=5 // pred_fallthru
        _
      %p243 = scmp.le.s32.totalorder 1, %s19
      %p244 = scmp.lt.s32.totalorder %s19, 3
      %p245 = pnand %p243, %p244
      %p246 = pneg %p245
      // Predicated region
      $region37: #{tpu_custom_call.1} parent=5 // pred_check
        _
      $region38: #{tpu_custom_call.1} parent=5 // pred_check_branch
        %248 = sbr.rel (%p245) target = $region40
      $region39: #{tpu_custom_call.1} parent=5 // pred_region
        %s249 = ssub.s32 %s19, 1
        %s250 = sand.u32 %s32, 1
        %s251 = scalar_lea.sflag [#allocation3], %s250
        %s252 = sand.u32 %s32, 1
        %s253 = smul.addr %s252, 128
        %s254 = scalar_lea.vmem [#allocation2], %s253
        // Predicated region
        $region41: #{tpu_custom_call.1} parent=39 // pred_check
          %p255 = pneg %p45
        $region42: #{tpu_custom_call.1} parent=39 // pred_check_branch
          %257 = sbr.rel (%p255) target = $region44
        $region43: #{tpu_custom_call.1} parent=39 // pred_region
          %258 = dma.done %s251, 2048
        $region44: #{tpu_custom_call.1} parent=39 // pred_fallthru
          _
        // Predicated region
        $region45: #{tpu_custom_call.1} parent=39 // pred_check
          %p259 = pneg %p66
        $region46: #{tpu_custom_call.1} parent=39 // pred_check_branch
          %261 = sbr.rel (%p259) target = $region48
        $region47: #{tpu_custom_call.1} parent=39 // pred_region
          %262 = dma.done [#allocation6], 2048
        $region48: #{tpu_custom_call.1} parent=39 // pred_fallthru
          _
        // Predicated region
        $region49: #{tpu_custom_call.1} parent=39 // pred_check
          %p263 = pneg %p87
        $region50: #{tpu_custom_call.1} parent=39 // pred_check_branch
          %265 = sbr.rel (%p263) target = $region52
        $region51: #{tpu_custom_call.1} parent=39 // pred_region
          %266 = dma.done [#allocation6], 32
        $region52: #{tpu_custom_call.1} parent=39 // pred_fallthru
          _
        // Predicated region
        $region53: #{tpu_custom_call.1} parent=39 // pred_check
          %p267 = pneg %p108
        $region54: #{tpu_custom_call.1} parent=39 // pred_check_branch
          %269 = sbr.rel (%p267) target = $region56
        $region55: #{tpu_custom_call.1} parent=39 // pred_region
          %270 = dma.done [#allocation9], 2048
        $region56: #{tpu_custom_call.1} parent=39 // pred_fallthru
          _
        // Predicated region
        $region57: #{tpu_custom_call.1} parent=39 // pred_check
          %p271 = pneg %p129
        $region58: #{tpu_custom_call.1} parent=39 // pred_check_branch
          %273 = sbr.rel (%p271) target = $region60
        $region59: #{tpu_custom_call.1} parent=39 // pred_region
          %274 = dma.done [#allocation9], 16
        $region60: #{tpu_custom_call.1} parent=39 // pred_fallthru
          _
        %s275 = sand.u32 %s32, 1
        %s276 = scalar_lea.sflag [#allocation3], %s275
        %s277 = sand.u32 %s32, 1
        %s278 = smul.addr %s277, 128
        %s279 = scalar_lea.vmem [#allocation2], %s278
        %p280 = pneg %p45
        %p281 = pneg %p42
        %p282 = pneg %p66
        %p283 = pneg %p63
        %p284 = pneg %p87
        %p285 = pneg %p84
        %p286 = pneg %p108
        %p287 = pneg %p105
        %p288 = pneg %p129
        %p289 = pneg %p126
        %p290 = pneg %p155
        %p291 = pneg %p152
        %s292 = sand.u32 %s142, 1
        %s293 = scalar_lea.sflag [#allocation4], %s292
        %s294 = sand.u32 %s142, 1
        %s295 = smul.addr %s294, 128
        %s296 = scalar_lea.vmem [#allocation11], %s295
        %s297 = smul.u32 16, %s24
        %s298 = smul.u32 16, %s24
        %v300 = vld [vmem:[%s254] sm:$0xff]
        %v301 = vld [vmem:[%s254 + $0x8] sm:$0xff]
        %v302 = vld [vmem:[%s254 + $0x10] sm:$0xff]
        %v303 = vld [vmem:[%s254 + $0x18] sm:$0xff]
        %v304 = vld [vmem:[%s254 + $0x20] sm:$0xff]
        %v305 = vld [vmem:[%s254 + $0x28] sm:$0xff]
        %v306 = vld [vmem:[%s254 + $0x30] sm:$0xff]
        %v307 = vld [vmem:[%s254 + $0x38] sm:$0xff]
        %v308 = vld [vmem:[%s254 + $0x40] sm:$0xff]
        %v309 = vld [vmem:[%s254 + $0x48] sm:$0xff]
        %v310 = vld [vmem:[%s254 + $0x50] sm:$0xff]
        %v311 = vld [vmem:[%s254 + $0x58] sm:$0xff]
        %v312 = vld [vmem:[%s254 + $0x60] sm:$0xff]
        %v313 = vld [vmem:[%s254 + $0x68] sm:$0xff]
        %v314 = vld [vmem:[%s254 + $0x70] sm:$0xff]
        %v315 = vld [vmem:[%s254 + $0x78] sm:$0xff]
        %v316 = vpack.c.bf16 %v301, %v300
        %v317 = vpack.c.bf16 %v303, %v302
        %v318 = vpack.c.bf16 %v305, %v304
        %v319 = vpack.c.bf16 %v307, %v306
        %v320 = vpack.c.bf16 %v309, %v308
        %v321 = vpack.c.bf16 %v311, %v310
        %v322 = vpack.c.bf16 %v313, %v312
        %v323 = vpack.c.bf16 %v315, %v314
        %v324 = vld [vmem:[#allocation5] sm:$0xff]
        %v325 = vld [vmem:[#allocation5 + $0x8] sm:$0xff]
        %v326 = vld [vmem:[#allocation5 + $0x10] sm:$0xff]
        %v327 = vld [vmem:[#allocation5 + $0x18] sm:$0xff]
        %v328 = vld [vmem:[#allocation5 + $0x20] sm:$0xff]
        %v329 = vld [vmem:[#allocation5 + $0x28] sm:$0xff]
        %v330 = vld [vmem:[#allocation5 + $0x30] sm:$0xff]
        %v331 = vld [vmem:[#allocation5 + $0x38] sm:$0xff]
        %v332 = vld [vmem:[#allocation5 + $0x40] sm:$0xff]
        %v333 = vld [vmem:[#allocation5 + $0x48] sm:$0xff]
        %v334 = vld [vmem:[#allocation5 + $0x50] sm:$0xff]
        %v335 = vld [vmem:[#allocation5 + $0x58] sm:$0xff]
        %v336 = vld [vmem:[#allocation5 + $0x60] sm:$0xff]
        %v337 = vld [vmem:[#allocation5 + $0x68] sm:$0xff]
        %v338 = vld [vmem:[#allocation5 + $0x70] sm:$0xff]
        %v339 = vld [vmem:[#allocation5 + $0x78] sm:$0xff]
        %v340 = vld [vmem:[#allocation7] sm:$0x3]
        %v342 = vlaneseq
        %v343 = vshrl.u32 %v342, 7
        %v344 = vsub.s32 0, %v343
        %v345 = vrot.slane %v340, %v344
        %v346 = vlaneseq
        %v347 = vshrl.u32 %v346, 7
        %v348 = vsub.s32 1, %v347
        %v349 = vrot.slane %v340, %v348
        %v368 = vunpack.c.l.b16 %v324
        %v369 = vunpack.c.h.b16 %v324
        %v370 = vunpack.c.l.b16 %v325
        %v371 = vunpack.c.h.b16 %v325
        %v372 = vunpack.c.l.b16 %v326
        %v373 = vunpack.c.h.b16 %v326
        %v374 = vunpack.c.l.b16 %v327
        %v375 = vunpack.c.h.b16 %v327
        %v376 = vunpack.c.l.b16 %v328
        %v377 = vunpack.c.h.b16 %v328
        %v378 = vunpack.c.l.b16 %v329
        %v379 = vunpack.c.h.b16 %v329
        %v380 = vunpack.c.l.b16 %v330
        %v381 = vunpack.c.h.b16 %v330
        %v382 = vunpack.c.l.b16 %v331
        %v383 = vunpack.c.h.b16 %v331
        %v384 = vunpack.c.l.b16 %v332
        %v385 = vunpack.c.h.b16 %v332
        %v386 = vunpack.c.l.b16 %v333
        %v387 = vunpack.c.h.b16 %v333
        %v388 = vunpack.c.l.b16 %v334
        %v389 = vunpack.c.h.b16 %v334
        %v390 = vunpack.c.l.b16 %v335
        %v391 = vunpack.c.h.b16 %v335
        %v392 = vunpack.c.l.b16 %v336
        %v393 = vunpack.c.h.b16 %v336
        %v394 = vunpack.c.l.b16 %v337
        %v395 = vunpack.c.h.b16 %v337
        %v396 = vunpack.c.l.b16 %v338
        %v397 = vunpack.c.h.b16 %v338
        %v398 = vunpack.c.l.b16 %v339
        %v399 = vunpack.c.h.b16 %v339
        %v400 = vpack.c.b16 %v370, %v368
        %v401 = vpack.c.b16 %v371, %v369
        %v402 = vpack.c.b16 %v374, %v372
        %v403 = vpack.c.b16 %v375, %v373
        %v404 = vpack.c.b16 %v378, %v376
        %v405 = vpack.c.b16 %v379, %v377
        %v406 = vpack.c.b16 %v382, %v380
        %v407 = vpack.c.b16 %v383, %v381
        %v408 = vpack.c.b16 %v386, %v384
        %v409 = vpack.c.b16 %v387, %v385
        %v410 = vpack.c.b16 %v390, %v388
        %v411 = vpack.c.b16 %v391, %v389
        %v412 = vpack.c.b16 %v394, %v392
        %v413 = vpack.c.b16 %v395, %v393
        %v414 = vpack.c.b16 %v398, %v396
        %v415 = vpack.c.b16 %v399, %v397
        %432 = vmatprep.subr.bf16.mxu0 %v401
        %433 = vmatpush1.bf16.msra.mxu0 %v400
        %434 = vmatprep.subr.bf16.mxu0 %v403
        %435 = vmatpush1.bf16.msra.mxu0 %v402
        %436 = vmatprep.subr.bf16.mxu0 %v405
        %437 = vmatpush1.bf16.msra.mxu0 %v404
        %438 = vmatprep.subr.bf16.mxu0 %v407
        %439 = vmatpush1.bf16.msra.mxu0 %v406
        %440 = vmatprep.subr.bf16.mxu0 %v409
        %441 = vmatpush1.bf16.msra.mxu0 %v408
        %442 = vmatprep.subr.bf16.mxu0 %v411
        %443 = vmatpush1.bf16.msra.mxu0 %v410
        %444 = vmatprep.subr.bf16.mxu0 %v413
        %445 = vmatpush1.bf16.msra.mxu0 %v412
        %446 = vmatprep.subr.bf16.mxu0 %v415
        %447 = vmatpush1.bf16.msra.mxu0 %v414
        %448 = vmatprep.subr.bf16.mxu0 0
        %449 = vmatpush1.bf16.msra.mxu0 0
        %450 = vmatprep.subr.bf16.mxu0 0
        %451 = vmatpush1.bf16.msra.mxu0 0
        %452 = vmatprep.subr.bf16.mxu0 0
        %453 = vmatpush1.bf16.msra.mxu0 0
        %454 = vmatprep.subr.bf16.mxu0 0
        %455 = vmatpush1.bf16.msra.mxu0 0
        %456 = vmatprep.subr.bf16.mxu0 0
        %457 = vmatpush1.bf16.msra.mxu0 0
        %458 = vmatprep.subr.bf16.mxu0 0
        %459 = vmatpush1.bf16.msra.mxu0 0
        %460 = vmatprep.subr.bf16.mxu0 0
        %461 = vmatpush1.bf16.msra.mxu0 0
        %462 = vmatprep.subr.bf16.mxu0 0
        %463 = vmatpush1.bf16.msra.mxu0 0
        %464 = vmatprep.mubr.bf16.mxu0 0
        %465 = vmatmul.mubr.bf16.gmra.mrb[0].mxu0 %v316
        %v466 = vpop.f32.mrb[0].mxu0
        %v467 = vadd.f32 %v345, %v466
        %v468 = vpop.f32.mrb[0].mxu0
        %v469 = vadd.f32 %v349, %v468
        %v470 = vpop.f32.mrb[0].mxu0
        %v471 = vadd.f32 %v345, %v470
        %v472 = vpop.f32.mrb[0].mxu0
        %v473 = vadd.f32 %v349, %v472
        %474 = vmatprep.mubr.bf16.mxu0 0
        %475 = vmatmul.mubr.bf16.gmra.mrb[0].mxu0 %v317
        %v476 = vpop.f32.mrb[0].mxu0
        %v477 = vadd.f32 %v345, %v476
        %v478 = vpop.f32.mrb[0].mxu0
        %v479 = vadd.f32 %v349, %v478
        %v480 = vpop.f32.mrb[0].mxu0
        %v481 = vadd.f32 %v345, %v480
        %v482 = vpop.f32.mrb[0].mxu0
        %v483 = vadd.f32 %v349, %v482
        %484 = vmatprep.mubr.bf16.mxu0 0
        %485 = vmatmul.mubr.bf16.gmra.mrb[0].mxu0 %v318
        %v486 = vpop.f32.mrb[0].mxu0
        %v487 = vadd.f32 %v345, %v486
        %v488 = vpop.f32.mrb[0].mxu0
        %v489 = vadd.f32 %v349, %v488
        %v490 = vpop.f32.mrb[0].mxu0
        %v491 = vadd.f32 %v345, %v490
        %v492 = vpop.f32.mrb[0].mxu0
        %v493 = vadd.f32 %v349, %v492
        %494 = vmatprep.mubr.bf16.mxu0 0
        %495 = vmatmul.mubr.bf16.gmra.mrb[0].mxu0 %v319
        %v496 = vpop.f32.mrb[0].mxu0
        %v497 = vadd.f32 %v345, %v496
        %v498 = vpop.f32.mrb[0].mxu0
        %v499 = vadd.f32 %v349, %v498
        %v500 = vpop.f32.mrb[0].mxu0
        %v501 = vadd.f32 %v345, %v500
        %v502 = vpop.f32.mrb[0].mxu0
        %v503 = vadd.f32 %v349, %v502
        %504 = vmatprep.mubr.bf16.mxu0 0
        %505 = vmatmul.mubr.bf16.gmra.mrb[0].mxu0 %v320
        %v506 = vpop.f32.mrb[0].mxu0
        %v507 = vadd.f32 %v345, %v506
        %v508 = vpop.f32.mrb[0].mxu0
        %v509 = vadd.f32 %v349, %v508
        %v510 = vpop.f32.mrb[0].mxu0
        %v511 = vadd.f32 %v345, %v510
        %v512 = vpop.f32.mrb[0].mxu0
        %v513 = vadd.f32 %v349, %v512
        %514 = vmatprep.mubr.bf16.mxu0 0
        %515 = vmatmul.mubr.bf16.gmra.mrb[0].mxu0 %v321
        %v516 = vpop.f32.mrb[0].mxu0
        %v517 = vadd.f32 %v345, %v516
        %v518 = vpop.f32.mrb[0].mxu0
        %v519 = vadd.f32 %v349, %v518
        %v520 = vpop.f32.mrb[0].mxu0
        %v521 = vadd.f32 %v345, %v520
        %v522 = vpop.f32.mrb[0].mxu0
        %v523 = vadd.f32 %v349, %v522
        %524 = vmatprep.mubr.bf16.mxu0 0
        %525 = vmatmul.mubr.bf16.gmra.mrb[0].mxu0 %v322
        %v526 = vpop.f32.mrb[0].mxu0
        %v527 = vadd.f32 %v345, %v526
        %v528 = vpop.f32.mrb[0].mxu0
        %v529 = vadd.f32 %v349, %v528
        %v530 = vpop.f32.mrb[0].mxu0
        %v531 = vadd.f32 %v345, %v530
        %v532 = vpop.f32.mrb[0].mxu0
        %v533 = vadd.f32 %v349, %v532
        %534 = vmatprep.mubr.bf16.mxu0 0
        %535 = vmatmul.mubr.bf16.gmra.mrb[0].mxu0 %v323
        %v536 = vpop.f32.mrb[0].mxu0
        %v537 = vadd.f32 %v345, %v536
        %v538 = vpop.f32.mrb[0].mxu0
        %v539 = vadd.f32 %v349, %v538
        %v540 = vpop.f32.mrb[0].mxu0
        %v541 = vadd.f32 %v345, %v540
        %v542 = vpop.f32.mrb[0].mxu0
        %v543 = vadd.f32 %v349, %v542
        %544 = vdwg.mxu0
        %v545 = vmax.f32 %v467, 0.0
        %v546 = vmax.f32 %v469, 0.0
        %v547 = vmax.f32 %v471, 0.0
        %v548 = vmax.f32 %v473, 0.0
        %v549 = vmax.f32 %v477, 0.0
        %v550 = vmax.f32 %v479, 0.0
        %v551 = vmax.f32 %v481, 0.0
        %v552 = vmax.f32 %v483, 0.0
        %v553 = vmax.f32 %v487, 0.0
        %v554 = vmax.f32 %v489, 0.0
        %v555 = vmax.f32 %v491, 0.0
        %v556 = vmax.f32 %v493, 0.0
        %v557 = vmax.f32 %v497, 0.0
        %v558 = vmax.f32 %v499, 0.0
        %v559 = vmax.f32 %v501, 0.0
        %v560 = vmax.f32 %v503, 0.0
        %v561 = vmax.f32 %v507, 0.0
        %v562 = vmax.f32 %v509, 0.0
        %v563 = vmax.f32 %v511, 0.0
        %v564 = vmax.f32 %v513, 0.0
        %v565 = vmax.f32 %v517, 0.0
        %v566 = vmax.f32 %v519, 0.0
        %v567 = vmax.f32 %v521, 0.0
        %v568 = vmax.f32 %v523, 0.0
        %v569 = vmax.f32 %v527, 0.0
        %v570 = vmax.f32 %v529, 0.0
        %v571 = vmax.f32 %v531, 0.0
        %v572 = vmax.f32 %v533, 0.0
        %v573 = vmax.f32 %v537, 0.0
        %v574 = vmax.f32 %v539, 0.0
        %v575 = vmax.f32 %v541, 0.0
        %v576 = vmax.f32 %v543, 0.0
        %v577 = vpack.c.bf16 %v547, %v545
        %v578 = vpack.c.bf16 %v548, %v546
        %v579 = vpack.c.bf16 %v551, %v549
        %v580 = vpack.c.bf16 %v552, %v550
        %v581 = vpack.c.bf16 %v555, %v553
        %v582 = vpack.c.bf16 %v556, %v554
        %v583 = vpack.c.bf16 %v559, %v557
        %v584 = vpack.c.bf16 %v560, %v558
        %v585 = vpack.c.bf16 %v563, %v561
        %v586 = vpack.c.bf16 %v564, %v562
        %v587 = vpack.c.bf16 %v567, %v565
        %v588 = vpack.c.bf16 %v568, %v566
        %v589 = vpack.c.bf16 %v571, %v569
        %v590 = vpack.c.bf16 %v572, %v570
        %v591 = vpack.c.bf16 %v575, %v573
        %v592 = vpack.c.bf16 %v576, %v574
        %v593 = vld [vmem:[#allocation8] sm:$0xf]
        %v594 = vld [vmem:[#allocation8 + $0x4] sm:$0xf]
        %v595 = vld [vmem:[#allocation8 + $0x8] sm:$0xf]
        %v596 = vld [vmem:[#allocation8 + $0xc] sm:$0xf]
        %v597 = vld [vmem:[#allocation8 + $0x10] sm:$0xf]
        %v598 = vld [vmem:[#allocation8 + $0x14] sm:$0xf]
        %v599 = vld [vmem:[#allocation8 + $0x18] sm:$0xf]
        %v600 = vld [vmem:[#allocation8 + $0x1c] sm:$0xf]
        %v601 = vld [vmem:[#allocation8 + $0x20] sm:$0xf]
        %v602 = vld [vmem:[#allocation8 + $0x24] sm:$0xf]
        %v603 = vld [vmem:[#allocation8 + $0x28] sm:$0xf]
        %v604 = vld [vmem:[#allocation8 + $0x2c] sm:$0xf]
        %v605 = vld [vmem:[#allocation8 + $0x30] sm:$0xf]
        %v606 = vld [vmem:[#allocation8 + $0x34] sm:$0xf]
        %v607 = vld [vmem:[#allocation8 + $0x38] sm:$0xf]
        %v608 = vld [vmem:[#allocation8 + $0x3c] sm:$0xf]
        %v609 = vld [vmem:[#allocation8 + $0x40] sm:$0xf]
        %v610 = vld [vmem:[#allocation8 + $0x44] sm:$0xf]
        %v611 = vld [vmem:[#allocation8 + $0x48] sm:$0xf]
        %v612 = vld [vmem:[#allocation8 + $0x4c] sm:$0xf]
        %v613 = vld [vmem:[#allocation8 + $0x50] sm:$0xf]
        %v614 = vld [vmem:[#allocation8 + $0x54] sm:$0xf]
        %v615 = vld [vmem:[#allocation8 + $0x58] sm:$0xf]
        %v616 = vld [vmem:[#allocation8 + $0x5c] sm:$0xf]
        %v617 = vld [vmem:[#allocation8 + $0x60] sm:$0xf]
        %v618 = vld [vmem:[#allocation8 + $0x64] sm:$0xf]
        %v619 = vld [vmem:[#allocation8 + $0x68] sm:$0xf]
        %v620 = vld [vmem:[#allocation8 + $0x6c] sm:$0xf]
        %v621 = vld [vmem:[#allocation8 + $0x70] sm:$0xf]
        %v622 = vld [vmem:[#allocation8 + $0x74] sm:$0xf]
        %v623 = vld [vmem:[#allocation8 + $0x78] sm:$0xf]
        %v624 = vld [vmem:[#allocation8 + $0x7c] sm:$0xf]
        %v625 = vld [vmem:[#allocation10] sm:$0x1]
        %v627 = vlaneseq
        %v628 = vshrl.u32 %v627, 7
        %v629 = vsub.s32 0, %v628
        %v630 = vrot.slane %v625, %v629
        %v664 = vunpack.c.l.b16 %v593
        %v665 = vunpack.c.l.b16 %v594
        %v666 = vunpack.c.l.b16 %v595
        %v667 = vunpack.c.l.b16 %v596
        %v668 = vunpack.c.l.b16 %v597
        %v669 = vunpack.c.l.b16 %v598
        %v670 = vunpack.c.l.b16 %v599
        %v671 = vunpack.c.l.b16 %v600
        %v672 = vunpack.c.l.b16 %v601
        %v673 = vunpack.c.l.b16 %v602
        %v674 = vunpack.c.l.b16 %v603
        %v675 = vunpack.c.l.b16 %v604
        %v676 = vunpack.c.l.b16 %v605
        %v677 = vunpack.c.l.b16 %v606
        %v678 = vunpack.c.l.b16 %v607
        %v679 = vunpack.c.l.b16 %v608
        %v680 = vunpack.c.l.b16 %v609
        %v681 = vunpack.c.l.b16 %v610
        %v682 = vunpack.c.l.b16 %v611
        %v683 = vunpack.c.l.b16 %v612
        %v684 = vunpack.c.l.b16 %v613
        %v685 = vunpack.c.l.b16 %v614
        %v686 = vunpack.c.l.b16 %v615
        %v687 = vunpack.c.l.b16 %v616
        %v688 = vunpack.c.l.b16 %v617
        %v689 = vunpack.c.l.b16 %v618
        %v690 = vunpack.c.l.b16 %v619
        %v691 = vunpack.c.l.b16 %v620
        %v692 = vunpack.c.l.b16 %v621
        %v693 = vunpack.c.l.b16 %v622
        %v694 = vunpack.c.l.b16 %v623
        %v695 = vunpack.c.l.b16 %v624
        %v696 = vpack.c.b16 %v665, %v664
        %v697 = vpack.c.b16 %v667, %v666
        %v698 = vpack.c.b16 %v669, %v668
        %v699 = vpack.c.b16 %v671, %v670
        %v700 = vpack.c.b16 %v673, %v672
        %v701 = vpack.c.b16 %v675, %v674
        %v702 = vpack.c.b16 %v677, %v676
        %v703 = vpack.c.b16 %v679, %v678
        %v704 = vpack.c.b16 %v681, %v680
        %v705 = vpack.c.b16 %v683, %v682
        %v706 = vpack.c.b16 %v685, %v684
        %v707 = vpack.c.b16 %v687, %v686
        %v708 = vpack.c.b16 %v689, %v688
        %v709 = vpack.c.b16 %v691, %v690
        %v710 = vpack.c.b16 %v693, %v692
        %v711 = vpack.c.b16 %v695, %v694
        %728 = vmatprep.subr.bf16.mxu0 0
        %729 = vmatpush1.bf16.msra.mxu0 %v696
        %730 = vmatprep.subr.bf16.mxu0 0
        %731 = vmatpush1.bf16.msra.mxu0 %v697
        %732 = vmatprep.subr.bf16.mxu0 0
        %733 = vmatpush1.bf16.msra.mxu0 %v698
        %734 = vmatprep.subr.bf16.mxu0 0
        %735 = vmatpush1.bf16.msra.mxu0 %v699
        %736 = vmatprep.subr.bf16.mxu0 0
        %737 = vmatpush1.bf16.msra.mxu0 %v700
        %738 = vmatprep.subr.bf16.mxu0 0
        %739 = vmatpush1.bf16.msra.mxu0 %v701
        %740 = vmatprep.subr.bf16.mxu0 0
        %741 = vmatpush1.bf16.msra.mxu0 %v702
        %742 = vmatprep.subr.bf16.mxu0 0
        %743 = vmatpush1.bf16.msra.mxu0 %v703
        %744 = vmatprep.subr.bf16.mxu0 0
        %745 = vmatpush1.bf16.msra.mxu0 %v704
        %746 = vmatprep.subr.bf16.mxu0 0
        %747 = vmatpush1.bf16.msra.mxu0 %v705
        %748 = vmatprep.subr.bf16.mxu0 0
        %749 = vmatpush1.bf16.msra.mxu0 %v706
        %750 = vmatprep.subr.bf16.mxu0 0
        %751 = vmatpush1.bf16.msra.mxu0 %v707
        %752 = vmatprep.subr.bf16.mxu0 0
        %753 = vmatpush1.bf16.msra.mxu0 %v708
        %754 = vmatprep.subr.bf16.mxu0 0
        %755 = vmatpush1.bf16.msra.mxu0 %v709
        %756 = vmatprep.subr.bf16.mxu0 0
        %757 = vmatpush1.bf16.msra.mxu0 %v710
        %758 = vmatprep.subr.bf16.mxu0 0
        %759 = vmatpush1.bf16.msra.mxu0 %v711
        %760 = vmatprep.mubr.bf16.mxu0 %v578
        %761 = vmatmul.mubr.bf16.gmra.mrb[0].mxu0 %v577
        %v762 = vpop.f32.mrb[0].mxu0
        %v763 = vadd.f32 %v630, %v762
        %v764 = vpop.f32.mrb[0].mxu0
        %v765 = vpop.f32.mrb[0].mxu0
        %v766 = vadd.f32 %v630, %v765
        %v767 = vpop.f32.mrb[0].mxu0
        %768 = vmatprep.mubr.bf16.mxu0 %v580
        %769 = vmatmul.mubr.bf16.gmra.mrb[0].mxu0 %v579
        %v770 = vpop.f32.mrb[0].mxu0
        %v771 = vadd.f32 %v630, %v770
        %v772 = vpop.f32.mrb[0].mxu0
        %v773 = vpop.f32.mrb[0].mxu0
        %v774 = vadd.f32 %v630, %v773
        %v775 = vpop.f32.mrb[0].mxu0
        %776 = vmatprep.mubr.bf16.mxu0 %v582
        %777 = vmatmul.mubr.bf16.gmra.mrb[0].mxu0 %v581
        %v778 = vpop.f32.mrb[0].mxu0
        %v779 = vadd.f32 %v630, %v778
        %v780 = vpop.f32.mrb[0].mxu0
        %v781 = vpop.f32.mrb[0].mxu0
        %v782 = vadd.f32 %v630, %v781
        %v783 = vpop.f32.mrb[0].mxu0
        %784 = vmatprep.mubr.bf16.mxu0 %v584
        %785 = vmatmul.mubr.bf16.gmra.mrb[0].mxu0 %v583
        %v786 = vpop.f32.mrb[0].mxu0
        %v787 = vadd.f32 %v630, %v786
        %v788 = vpop.f32.mrb[0].mxu0
        %v789 = vpop.f32.mrb[0].mxu0
        %v790 = vadd.f32 %v630, %v789
        %v791 = vpop.f32.mrb[0].mxu0
        %792 = vmatprep.mubr.bf16.mxu0 %v586
        %793 = vmatmul.mubr.bf16.gmra.mrb[0].mxu0 %v585
        %v794 = vpop.f32.mrb[0].mxu0
        %v795 = vadd.f32 %v630, %v794
        %v796 = vpop.f32.mrb[0].mxu0
        %v797 = vpop.f32.mrb[0].mxu0
        %v798 = vadd.f32 %v630, %v797
        %v799 = vpop.f32.mrb[0].mxu0
        %800 = vmatprep.mubr.bf16.mxu0 %v588
        %801 = vmatmul.mubr.bf16.gmra.mrb[0].mxu0 %v587
        %v802 = vpop.f32.mrb[0].mxu0
        %v803 = vadd.f32 %v630, %v802
        %v804 = vpop.f32.mrb[0].mxu0
        %v805 = vpop.f32.mrb[0].mxu0
        %v806 = vadd.f32 %v630, %v805
        %v807 = vpop.f32.mrb[0].mxu0
        %808 = vmatprep.mubr.bf16.mxu0 %v590
        %809 = vmatmul.mubr.bf16.gmra.mrb[0].mxu0 %v589
        %v810 = vpop.f32.mrb[0].mxu0
        %v811 = vadd.f32 %v630, %v810
        %v812 = vpop.f32.mrb[0].mxu0
        %v813 = vpop.f32.mrb[0].mxu0
        %v814 = vadd.f32 %v630, %v813
        %v815 = vpop.f32.mrb[0].mxu0
        %816 = vmatprep.mubr.bf16.mxu0 %v592
        %817 = vmatmul.mubr.bf16.gmra.mrb[0].mxu0 %v591
        %v818 = vpop.f32.mrb[0].mxu0
        %v819 = vadd.f32 %v630, %v818
        %v820 = vpop.f32.mrb[0].mxu0
        %v821 = vpop.f32.mrb[0].mxu0
        %v822 = vadd.f32 %v630, %v821
        %v823 = vpop.f32.mrb[0].mxu0
        %824 = vdwg.mxu0
        %v825 = vtanh.pop %v763
        %v826 = vtanh.pop %v766
        %v827 = vtanh.pop %v771
        %v828 = vtanh.pop %v774
        %v829 = vtanh.pop %v779
        %v830 = vtanh.pop %v782
        %v831 = vtanh.pop %v787
        %v832 = vtanh.pop %v790
        %v833 = vtanh.pop %v795
        %v834 = vtanh.pop %v798
        %v835 = vtanh.pop %v803
        %v836 = vtanh.pop %v806
        %v837 = vtanh.pop %v811
        %v838 = vtanh.pop %v814
        %v839 = vtanh.pop %v819
        %v840 = vtanh.pop %v822
        %841 = vst [vmem:[%s296] sm:$0xff] %v825
        %842 = vst [vmem:[%s296 + $0x8] sm:$0xff] %v826
        %843 = vst [vmem:[%s296 + $0x10] sm:$0xff] %v827
        %844 = vst [vmem:[%s296 + $0x18] sm:$0xff] %v828
        %845 = vst [vmem:[%s296 + $0x20] sm:$0xff] %v829
        %846 = vst [vmem:[%s296 + $0x28] sm:$0xff] %v830
        %847 = vst [vmem:[%s296 + $0x30] sm:$0xff] %v831
        %848 = vst [vmem:[%s296 + $0x38] sm:$0xff] %v832
        %849 = vst [vmem:[%s296 + $0x40] sm:$0xff] %v833
        %850 = vst [vmem:[%s296 + $0x48] sm:$0xff] %v834
        %851 = vst [vmem:[%s296 + $0x50] sm:$0xff] %v835
        %852 = vst [vmem:[%s296 + $0x58] sm:$0xff] %v836
        %853 = vst [vmem:[%s296 + $0x60] sm:$0xff] %v837
        %854 = vst [vmem:[%s296 + $0x68] sm:$0xff] %v838
        %855 = vst [vmem:[%s296 + $0x70] sm:$0xff] %v839
        %856 = vst [vmem:[%s296 + $0x78] sm:$0xff] %v840
        %s857 = sand.u32 %s142, 1
        %s858 = scalar_lea.sflag [#allocation4], %s857
        %s859 = sand.u32 %s142, 1
        %s860 = smul.addr %s859, 128
        %s861 = scalar_lea.vmem [#allocation11], %s860
        // Predicated region
        $region61: #{tpu_custom_call.1} parent=39 // pred_check
          %p862 = pneg %p152
        $region62: #{tpu_custom_call.1} parent=39 // pred_check_branch
          %864 = sbr.rel (%p862) target = $region64
        $region63: #{tpu_custom_call.1} parent=39 // pred_region
          %s865 = smul.u32 16, %s24
          %s867 = ssub.s32 2048, 2048
          %868 = vsyncadd %s858, %s867
          %s869 = smul.addr %s865, 128
          %s870 = scalar_lea.hbm %s5, %s869
          %s871 = sshll.u32 %s861, 4
          %s872 = int_to_ptr.vmem [resolvable:$true] %s871
          %877 = dma.vmem_to_hbm [thread:$0]  %s872, 2048, %s870, %s858, 128, 128, 8
        $region64: #{tpu_custom_call.1} parent=39 // pred_fallthru
          _
      $region40: #{tpu_custom_call.1} parent=5 // pred_fallthru
        _
      %p878 = scmp.le.s32.totalorder 2, %s19
      // Predicated region
      $region65: #{tpu_custom_call.1} parent=5 // pred_check
        %p879 = pneg %p878
      $region66: #{tpu_custom_call.1} parent=5 // pred_check_branch
        %881 = sbr.rel (%p879) target = $region68
      $region67: #{tpu_custom_call.1} parent=5 // pred_region
        %s882 = ssub.s32 %s19, 2
        // Predicated region
        $region69: #{tpu_custom_call.1} parent=67 // pred_check
          %p883 = pneg %p158
        $region70: #{tpu_custom_call.1} parent=67 // pred_check_branch
          %885 = sbr.rel (%p883) target = $region72
        $region71: #{tpu_custom_call.1} parent=67 // pred_region
          %s886 = sand.u32 %s143, 1
          %s887 = scalar_lea.sflag [#allocation4], %s886
          %s888 = sand.u32 %s143, 1
          %s889 = smul.addr %s888, 128
          %s890 = scalar_lea.vmem [#allocation11], %s889
          %891 = dma.done %s887, 2048
        $region72: #{tpu_custom_call.1} parent=67 // pred_fallthru
          _
      $region68: #{tpu_custom_call.1} parent=5 // pred_fallthru
        _
    $region6: #{tpu_custom_call.1} parent=1 // loop_footer
      %s23 = sadd.s32 1, %s19
    $region7: #{tpu_custom_call.1} parent=1 // loop_footer_branch
      %18 = sbr.rel target = $region3
    $region8: #{tpu_custom_call.1} parent=1 // loop_exit
      _
    %892 = vsyncpa [#allocation3], 1
    %s893 = scalar_lea.sflag [#allocation3], 1
    %894 = vsyncpa %s893, 1
    %895 = vsyncpa [#allocation6], 1
    %896 = vsyncpa [#allocation9], 1
    %897 = vsyncpa [#allocation4], 1
    %s898 = scalar_lea.sflag [#allocation4], 1
    %899 = vsyncpa %s898, 1

// kernel: tpu_custom_call.1
$region0: #{tpu_custom_call.1}
  #allocation0 [shape = 'u32[]', space=smem, size = 0x4, offset = 0x4, fixed_abs, tag = 'smem constant byte address 0x4 - core index']
  #allocation1 [shape = 'u32[144,128]{1,0:T(1,128)}', space=vmem, size = 0x12000, scoped, tag = 'internal scratch']
  %s0 = inlined_call_operand.hbm [shape: f32[256,128], index: 0, kind: input, shape index: {}]
  %s1 = inlined_call_operand.hbm [shape: bf16[128,256], index: 1, kind: input, shape index: {}]
  %s2 = inlined_call_operand.hbm [shape: f32[1,256], index: 2, kind: input, shape index: {}]
  %s3 = inlined_call_operand.hbm [shape: bf16[256,128], index: 3, kind: input, shape index: {}]
  %s4 = inlined_call_operand.hbm [shape: f32[1,128], index: 4, kind: input, shape index: {}]
  %s5 = inlined_call_operand.hbm [shape: f32[256,128], index: 5, kind: output, shape index: {}]
  %s6 = sld [smem:[#allocation0]]
  $region73: #{tpu_custom_call.1} parent=0
    _
  %s8 = ssub.s32 1, %s6
  %s9 = scalar_select 0, %s8, %s6
  $region1: #{tpu_custom_call.1} parent=0
    #allocation2 [shape = 'u8[131072]{0}', space=vmem, size = 0x20000, scoped, tag = 'input window, operand 0']
    #allocation3 [shape = 's32[2]{0}', space=sflag, size = 0x8, scoped, tag = 'scoped memory for tpu_custom_call.1']
    #allocation4 [shape = 's32[2]{0}', space=sflag, size = 0x8, scoped, tag = 'scoped memory for tpu_custom_call.1']
    #allocation5 [shape = 'u8[65536]{0}', space=vmem, size = 0x10000, scoped, tag = 'input window, operand 1, single buffered']
    #allocation6 [shape = 's32[1]{0}', space=sflag, size = 0x4, scoped, tag = 'scoped memory for tpu_custom_call.1']
    #allocation7 [shape = 'u8[1024]{0}', space=vmem, size = 0x400, scoped, tag = 'input window, operand 2, single buffered']
    #allocation8 [shape = 'u8[65536]{0}', space=vmem, size = 0x10000, scoped, tag = 'input window, operand 3, single buffered']
    #allocation9 [shape = 's32[1]{0}', space=sflag, size = 0x4, scoped, tag = 'scoped memory for tpu_custom_call.1']
    #allocation10 [shape = 'u8[512]{0}', space=vmem, size = 0x400, scoped, tag = 'input window, operand 4, single buffered']
    #allocation11 [shape = 'u8[131072]{0}', space=vmem, size = 0x20000, scoped, tag = 'output window, operand 0']
    %10 = vsyncpa [#allocation3], 0
    %s11 = scalar_lea.sflag [#allocation3], 1
    %12 = vsyncpa %s11, 0
    %13 = vsyncpa [#allocation6], 0
    %14 = vsyncpa [#allocation9], 0
    %15 = vsyncpa [#allocation4], 0
    %s16 = scalar_lea.sflag [#allocation4], 1
    %17 = vsyncpa %s16, 0
    loop: start=0, step=1, limit=4
    $region2: #{tpu_custom_call.1} parent=1 // loop_pre_header
      _
    $region3: #{tpu_custom_call.1} parent=1 // loop_header
      %s19 = sphi 0, %s23
      %p20 = scmp.ge.s32.totalorder %s19, 4
      %s29 = sphi 0, %s31
      %s32 = sphi 0, %s29
      %s33 = sphi 0, %s32
      %s49 = sphi 0, %s33
      %s53 = sphi 0, %s53
      %s55 = sphi 0, %s53
      %s56 = sphi 0, %s55
      %s70 = sphi 0, %s56
      %s74 = sphi 0, %s74
      %s76 = sphi 0, %s74
      %s77 = sphi 0, %s76
      %s91 = sphi 0, %s77
      %s95 = sphi 0, %s95
      %s97 = sphi 0, %s95
      %s98 = sphi 0, %s97
      %s112 = sphi 0, %s98
      %s116 = sphi 0, %s116
      %s118 = sphi 0, %s116
      %s119 = sphi 0, %s118
      %s133 = sphi 0, %s119
      %s139 = sphi 0, %s141
      %s142 = sphi 0, %s139
      %s143 = sphi 0, %s142
      %s159 = sphi 0, %s143
    $region4: #{tpu_custom_call.1} parent=1 // loop_header_branch
      %22 = sbr.rel (%p20) target = $region8
    $region5: #{tpu_custom_call.1} parent=1 // loop_body
      %s24 = ssub.s32 %s19, 1
      %s25 = ssub.s32 %s19, 2
      %s26 = sadd.s32 %s19, 1
      %s27 = ssub.s32 %s19, %s26
      %p28 = scmp.eq.s32.totalorder %s27, 0
      %s30 = sadd.s32 %s29, 1
      %s31 = scalar_select %p28, %s29, %s30
      %p34 = pneg %p28
      %p35 = scmp.eq.s32.totalorder %s19, 1
      %p36 = por %p34, %p35
      %p37 = scmp.ne.s32.totalorder %s29, %s32
      %p38 = scmp.eq.s32.totalorder %s19, 0
      %p39 = por %p37, %p38
      %p40 = scmp.ne.s32.totalorder %s29, %s32
      %p41 = scmp.eq.s32.totalorder %s24, 1
      %p42 = por %p40, %p41
      %p43 = scmp.ne.s32.totalorder %s32, %s33
      %p44 = scmp.eq.s32.totalorder %s24, 0
      %p45 = por %p43, %p44
      %p46 = scmp.ne.s32.totalorder %s32, %s33
      %p47 = scmp.eq.s32.totalorder %s25, 1
      %p48 = por %p46, %p47
      %p50 = scmp.ne.s32.totalorder %s33, %s49
      %p51 = scmp.eq.s32.totalorder %s25, 0
      %p52 = por %p50, %p51
      %s54 = sadd.s32 %s53, 1
      %p57 = scmp.eq.s32.totalorder %s19, 1
      %p58 = scmp.ne.s32.totalorder %s53, %s55
      %p59 = scmp.eq.s32.totalorder %s19, 0
      %p60 = por %p58, %p59
      %p61 = scmp.ne.s32.totalorder %s53, %s55
      %p62 = scmp.eq.s32.totalorder %s24, 1
      %p63 = por %p61, %p62
      %p64 = scmp.ne.s32.totalorder %s55, %s56
      %p65 = scmp.eq.s32.totalorder %s24, 0
      %p66 = por %p64, %p65
      %p67 = scmp.ne.s32.totalorder %s55, %s56
      %p68 = scmp.eq.s32.totalorder %s25, 1
      %p69 = por %p67, %p68
      %p71 = scmp.ne.s32.totalorder %s56, %s70
      %p72 = scmp.eq.s32.totalorder %s25, 0
      %p73 = por %p71, %p72
      %s75 = sadd.s32 %s74, 1
      %p78 = scmp.eq.s32.totalorder %s19, 1
      %p79 = scmp.ne.s32.totalorder %s74, %s76
      %p80 = scmp.eq.s32.totalorder %s19, 0
      %p81 = por %p79, %p80
      %p82 = scmp.ne.s32.totalorder %s74, %s76
      %p83 = scmp.eq.s32.totalorder %s24, 1
      %p84 = por %p82, %p83
      %p85 = scmp.ne.s32.totalorder %s76, %s77
      %p86 = scmp.eq.s32.totalorder %s24, 0
      %p87 = por %p85, %p86
      %p88 = scmp.ne.s32.totalorder %s76, %s77
      %p89 = scmp.eq.s32.totalorder %s25, 1
      %p90 = por %p88, %p89
      %p92 = scmp.ne.s32.totalorder %s77, %s91
      %p93 = scmp.eq.s32.totalorder %s25, 0
      %p94 = por %p92, %p93
      %s96 = sadd.s32 %s95, 1
      %p99 = scmp.eq.s32.totalorder %s19, 1
      %p100 = scmp.ne.s32.totalorder %s95, %s97
      %p101 = scmp.eq.s32.totalorder %s19, 0
      %p102 = por %p100, %p101
      %p103 = scmp.ne.s32.totalorder %s95, %s97
      %p104 = scmp.eq.s32.totalorder %s24, 1
      %p105 = por %p103, %p104
      %p106 = scmp.ne.s32.totalorder %s97, %s98
      %p107 = scmp.eq.s32.totalorder %s24, 0
      %p108 = por %p106, %p107
      %p109 = scmp.ne.s32.totalorder %s97, %s98
      %p110 = scmp.eq.s32.totalorder %s25, 1
      %p111 = por %p109, %p110
      %p113 = scmp.ne.s32.totalorder %s98, %s112
      %p114 = scmp.eq.s32.totalorder %s25, 0
      %p115 = por %p113, %p114
      %s117 = sadd.s32 %s116, 1
      %p120 = scmp.eq.s32.totalorder %s19, 1
      %p121 = scmp.ne.s32.totalorder %s116, %s118
      %p122 = scmp.eq.s32.totalorder %s19, 0
      %p123 = por %p121, %p122
      %p124 = scmp.ne.s32.totalorder %s116, %s118
      %p125 = scmp.eq.s32.totalorder %s24, 1
      %p126 = por %p124, %p125
      %p127 = scmp.ne.s32.totalorder %s118, %s119
      %p128 = scmp.eq.s32.totalorder %s24, 0
      %p129 = por %p127, %p128
      %p130 = scmp.ne.s32.totalorder %s118, %s119
      %p131 = scmp.eq.s32.totalorder %s25, 1
      %p132 = por %p130, %p131
      %p134 = scmp.ne.s32.totalorder %s119, %s133
      %p135 = scmp.eq.s32.totalorder %s25, 0
      %p136 = por %p134, %p135
      %s137 = ssub.s32 %s19, %s26
      %p138 = scmp.eq.s32.totalorder %s137, 0
      %s140 = sadd.s32 %s139, 1
      %s141 = scalar_select %p138, %s139, %s140
      %p144 = pneg %p138
      %p145 = scmp.eq.s32.totalorder %s19, 1
      %p146 = por %p144, %p145
      %p147 = scmp.ne.s32.totalorder %s139, %s142
      %p148 = scmp.eq.s32.totalorder %s19, 0
      %p149 = por %p147, %p148
      %p150 = scmp.ne.s32.totalorder %s139, %s142
      %p151 = scmp.eq.s32.totalorder %s24, 1
      %p152 = por %p150, %p151
      %p153 = scmp.ne.s32.totalorder %s142, %s143
      %p154 = scmp.eq.s32.totalorder %s24, 0
      %p155 = por %p153, %p154
      %p156 = scmp.ne.s32.totalorder %s142, %s143
      %p157 = scmp.eq.s32.totalorder %s25, 1
      %p158 = por %p156, %p157
      %p160 = scmp.ne.s32.totalorder %s143, %s159
      %p161 = scmp.eq.s32.totalorder %s25, 0
      %p162 = por %p160, %p161
      %p163 = scmp.le.s32.totalorder 1, %s19
      %p164 = scmp.lt.s32.totalorder %s19, 3
      %p165 = pnand %p163, %p164
      %p166 = pneg %p165
      // Predicated region
      $region9: #{tpu_custom_call.1} parent=5 // pred_check
        _
      $region10: #{tpu_custom_call.1} parent=5 // pred_check_branch
        %168 = sbr.rel (%p165) target = $region12
      $region11: #{tpu_custom_call.1} parent=5 // pred_region
        %s169 = ssub.s32 %s19, 1
        // Predicated region
        $region13: #{tpu_custom_call.1} parent=11 // pred_check
          %p170 = pneg %p66
        $region14: #{tpu_custom_call.1} parent=11 // pred_check_branch
          %172 = sbr.rel (%p170) target = $region16
        $region15: #{tpu_custom_call.1} parent=11 // pred_region
          %s174 = ssub.s32 2048, 2048
          %175 = vsyncadd [#allocation6], %s174
          %s176 = sshll.u32 [#allocation5], 4
          %s177 = int_to_ptr.vmem [resolvable:$true] %s176
          %182 = dma.hbm_to_vmem [thread:$0]  %s1, 2048, %s177, [#allocation6], 128, 128, 8
        $region16: #{tpu_custom_call.1} parent=11 // pred_fallthru
          _
        // Predicated region
        $region17: #{tpu_custom_call.1} parent=11 // pred_check
          %p183 = pneg %p87
        $region18: #{tpu_custom_call.1} parent=11 // pred_check_branch
          %185 = sbr.rel (%p183) target = $region20
        $region19: #{tpu_custom_call.1} parent=11 // pred_region
          %s187 = ssub.s32 32, 32
          %188 = vsyncadd [#allocation6], %s187
          %s190 = sshll.u32 [#allocation7], 4
          %s191 = int_to_ptr.vmem [resolvable:$true] %s190
          %193 = dma.hbm_to_vmem [thread:$0]  %s2, 32, %s191, [#allocation6]
        $region20: #{tpu_custom_call.1} parent=11 // pred_fallthru
          _
        // Predicated region
        $region21: #{tpu_custom_call.1} parent=11 // pred_check
          %p194 = pneg %p108
        $region22: #{tpu_custom_call.1} parent=11 // pred_check_branch
          %196 = sbr.rel (%p194) target = $region24
        $region23: #{tpu_custom_call.1} parent=11 // pred_region
          %s198 = ssub.s32 2048, 2048
          %199 = vsyncadd [#allocation9], %s198
          %s200 = sshll.u32 [#allocation8], 4
          %s201 = int_to_ptr.vmem [resolvable:$true] %s200
          %206 = dma.hbm_to_vmem [thread:$0]  %s3, 2048, %s201, [#allocation9], 64, 64, 4
        $region24: #{tpu_custom_call.1} parent=11 // pred_fallthru
          _
        // Predicated region
        $region25: #{tpu_custom_call.1} parent=11 // pred_check
          %p207 = pneg %p129
        $region26: #{tpu_custom_call.1} parent=11 // pred_check_branch
          %209 = sbr.rel (%p207) target = $region28
        $region27: #{tpu_custom_call.1} parent=11 // pred_region
          %s211 = ssub.s32 16, 16
          %212 = vsyncadd [#allocation9], %s211
          %s214 = sshll.u32 [#allocation10], 4
          %s215 = int_to_ptr.vmem [resolvable:$true] %s214
          %217 = dma.hbm_to_vmem [thread:$0]  %s4, 16, %s215, [#allocation9]
        $region28: #{tpu_custom_call.1} parent=11 // pred_fallthru
          _
      $region12: #{tpu_custom_call.1} parent=5 // pred_fallthru
        _
      %p218 = scmp.lt.s32.totalorder %s19, 2
      // Predicated region
      $region29: #{tpu_custom_call.1} parent=5 // pred_check
        %p219 = pneg %p218
      $region30: #{tpu_custom_call.1} parent=5 // pred_check_branch
        %221 = sbr.rel (%p219) target = $region32
      $region31: #{tpu_custom_call.1} parent=5 // pred_region
        // Predicated region
        $region33: #{tpu_custom_call.1} parent=31 // pred_check
          %p222 = pneg %p39
        $region34: #{tpu_custom_call.1} parent=31 // pred_check_branch
          %224 = sbr.rel (%p222) target = $region36
        $region35: #{tpu_custom_call.1} parent=31 // pred_region
          %s225 = sand.u32 %s29, 1
          %s226 = scalar_lea.sflag [#allocation3], %s225
          %s227 = sand.u32 %s29, 1
          %s228 = smul.addr %s227, 128
          %s229 = scalar_lea.vmem [#allocation2], %s228
          %s230 = smul.u32 16, %s19
          %s232 = ssub.s32 2048, 2048
          %233 = vsyncadd %s226, %s232
          %s234 = smul.addr %s230, 128
          %s235 = scalar_lea.hbm %s0, %s234
          %s236 = sshll.u32 %s229, 4
          %s237 = int_to_ptr.vmem [resolvable:$true] %s236
          %242 = dma.hbm_to_vmem [thread:$0]  %s235, 2048, %s237, %s226, 128, 128, 8
        $region36: #{tpu_custom_call.1} parent=31 // pred_fallthru
          _
      $region32: #{tpu_custom_call.1} parent=5 // pred_fallthru
        _
      %p243 = scmp.le.s32.totalorder 1, %s19
      %p244 = scmp.lt.s32.totalorder %s19, 3
      %p245 = pnand %p243, %p244
      %p246 = pneg %p245
      // Predicated region
      $region37: #{tpu_custom_call.1} parent=5 // pred_check
        _
      $region38: #{tpu_custom_call.1} parent=5 // pred_check_branch
        %248 = sbr.rel (%p245) target = $region40
      $region39: #{tpu_custom_call.1} parent=5 // pred_region
        %s249 = ssub.s32 %s19, 1
        %s250 = sand.u32 %s32, 1
        %s251 = scalar_lea.sflag [#allocation3], %s250
        %s252 = sand.u32 %s32, 1
        %s253 = smul.addr %s252, 128
        %s254 = scalar_lea.vmem [#allocation2], %s253
        // Predicated region
        $region41: #{tpu_custom_call.1} parent=39 // pred_check
          %p255 = pneg %p45
        $region42: #{tpu_custom_call.1} parent=39 // pred_check_branch
          %257 = sbr.rel (%p255) target = $region44
        $region43: #{tpu_custom_call.1} parent=39 // pred_region
          %258 = dma.done %s251, 2048
        $region44: #{tpu_custom_call.1} parent=39 // pred_fallthru
          _
        // Predicated region
        $region45: #{tpu_custom_call.1} parent=39 // pred_check
          %p259 = pneg %p66
        $region46: #{tpu_custom_call.1} parent=39 // pred_check_branch
          %261 = sbr.rel (%p259) target = $region48
        $region47: #{tpu_custom_call.1} parent=39 // pred_region
          %262 = dma.done [#allocation6], 2048
        $region48: #{tpu_custom_call.1} parent=39 // pred_fallthru
          _
        // Predicated region
        $region49: #{tpu_custom_call.1} parent=39 // pred_check
          %p263 = pneg %p87
        $region50: #{tpu_custom_call.1} parent=39 // pred_check_branch
          %265 = sbr.rel (%p263) target = $region52
        $region51: #{tpu_custom_call.1} parent=39 // pred_region
          %266 = dma.done [#allocation6], 32
        $region52: #{tpu_custom_call.1} parent=39 // pred_fallthru
          _
        // Predicated region
        $region53: #{tpu_custom_call.1} parent=39 // pred_check
          %p267 = pneg %p108
        $region54: #{tpu_custom_call.1} parent=39 // pred_check_branch
          %269 = sbr.rel (%p267) target = $region56
        $region55: #{tpu_custom_call.1} parent=39 // pred_region
          %270 = dma.done [#allocation9], 2048
        $region56: #{tpu_custom_call.1} parent=39 // pred_fallthru
          _
        // Predicated region
        $region57: #{tpu_custom_call.1} parent=39 // pred_check
          %p271 = pneg %p129
        $region58: #{tpu_custom_call.1} parent=39 // pred_check_branch
          %273 = sbr.rel (%p271) target = $region60
        $region59: #{tpu_custom_call.1} parent=39 // pred_region
          %274 = dma.done [#allocation9], 16
        $region60: #{tpu_custom_call.1} parent=39 // pred_fallthru
          _
        %s275 = sand.u32 %s32, 1
        %s276 = scalar_lea.sflag [#allocation3], %s275
        %s277 = sand.u32 %s32, 1
        %s278 = smul.addr %s277, 128
        %s279 = scalar_lea.vmem [#allocation2], %s278
        %p280 = pneg %p45
        %p281 = pneg %p42
        %p282 = pneg %p66
        %p283 = pneg %p63
        %p284 = pneg %p87
        %p285 = pneg %p84
        %p286 = pneg %p108
        %p287 = pneg %p105
        %p288 = pneg %p129
        %p289 = pneg %p126
        %p290 = pneg %p155
        %p291 = pneg %p152
        %s292 = sand.u32 %s142, 1
        %s293 = scalar_lea.sflag [#allocation4], %s292
        %s294 = sand.u32 %s142, 1
        %s295 = smul.addr %s294, 128
        %s296 = scalar_lea.vmem [#allocation11], %s295
        %s297 = smul.u32 16, %s24
        %s298 = smul.u32 16, %s24
        %v300 = vld [vmem:[%s254] sm:$0xff]
        %v301 = vld [vmem:[%s254 + $0x8] sm:$0xff]
        %v302 = vld [vmem:[%s254 + $0x10] sm:$0xff]
        %v303 = vld [vmem:[%s254 + $0x18] sm:$0xff]
        %v304 = vld [vmem:[%s254 + $0x20] sm:$0xff]
        %v305 = vld [vmem:[%s254 + $0x28] sm:$0xff]
        %v306 = vld [vmem:[%s254 + $0x30] sm:$0xff]
        %v307 = vld [vmem:[%s254 + $0x38] sm:$0xff]
        %v308 = vld [vmem:[%s254 + $0x40] sm:$0xff]
        %v309 = vld [vmem:[%s254 + $0x48] sm:$0xff]
        %v310 = vld [vmem:[%s254 + $0x50] sm:$0xff]
        %v311 = vld [vmem:[%s254 + $0x58] sm:$0xff]
        %v312 = vld [vmem:[%s254 + $0x60] sm:$0xff]
        %v313 = vld [vmem:[%s254 + $0x68] sm:$0xff]
        %v314 = vld [vmem:[%s254 + $0x70] sm:$0xff]
        %v315 = vld [vmem:[%s254 + $0x78] sm:$0xff]
        %v316 = vpack.c.bf16 %v301, %v300
        %v317 = vpack.c.bf16 %v303, %v302
        %v318 = vpack.c.bf16 %v305, %v304
        %v319 = vpack.c.bf16 %v307, %v306
        %v320 = vpack.c.bf16 %v309, %v308
        %v321 = vpack.c.bf16 %v311, %v310
        %v322 = vpack.c.bf16 %v313, %v312
        %v323 = vpack.c.bf16 %v315, %v314
        %v324 = vld [vmem:[#allocation5] sm:$0xff]
        %v325 = vld [vmem:[#allocation5 + $0x8] sm:$0xff]
        %v326 = vld [vmem:[#allocation5 + $0x10] sm:$0xff]
        %v327 = vld [vmem:[#allocation5 + $0x18] sm:$0xff]
        %v328 = vld [vmem:[#allocation5 + $0x20] sm:$0xff]
        %v329 = vld [vmem:[#allocation5 + $0x28] sm:$0xff]
        %v330 = vld [vmem:[#allocation5 + $0x30] sm:$0xff]
        %v331 = vld [vmem:[#allocation5 + $0x38] sm:$0xff]
        %v332 = vld [vmem:[#allocation5 + $0x40] sm:$0xff]
        %v333 = vld [vmem:[#allocation5 + $0x48] sm:$0xff]
        %v334 = vld [vmem:[#allocation5 + $0x50] sm:$0xff]
        %v335 = vld [vmem:[#allocation5 + $0x58] sm:$0xff]
        %v336 = vld [vmem:[#allocation5 + $0x60] sm:$0xff]
        %v337 = vld [vmem:[#allocation5 + $0x68] sm:$0xff]
        %v338 = vld [vmem:[#allocation5 + $0x70] sm:$0xff]
        %v339 = vld [vmem:[#allocation5 + $0x78] sm:$0xff]
        %v340 = vld [vmem:[#allocation7] sm:$0x3]
        %v342 = vlaneseq
        %v343 = vshrl.u32 %v342, 7
        %v344 = vsub.s32 0, %v343
        %v345 = vrot.slane %v340, %v344
        %v346 = vlaneseq
        %v347 = vshrl.u32 %v346, 7
        %v348 = vsub.s32 1, %v347
        %v349 = vrot.slane %v340, %v348
        %v368 = vunpack.c.l.b16 %v324
        %v369 = vunpack.c.h.b16 %v324
        %v370 = vunpack.c.l.b16 %v325
        %v371 = vunpack.c.h.b16 %v325
        %v372 = vunpack.c.l.b16 %v326
        %v373 = vunpack.c.h.b16 %v326
        %v374 = vunpack.c.l.b16 %v327
        %v375 = vunpack.c.h.b16 %v327
        %v376 = vunpack.c.l.b16 %v328
        %v377 = vunpack.c.h.b16 %v328
        %v378 = vunpack.c.l.b16 %v329
        %v379 = vunpack.c.h.b16 %v329
        %v380 = vunpack.c.l.b16 %v330
        %v381 = vunpack.c.h.b16 %v330
        %v382 = vunpack.c.l.b16 %v331
        %v383 = vunpack.c.h.b16 %v331
        %v384 = vunpack.c.l.b16 %v332
        %v385 = vunpack.c.h.b16 %v332
        %v386 = vunpack.c.l.b16 %v333
        %v387 = vunpack.c.h.b16 %v333
        %v388 = vunpack.c.l.b16 %v334
        %v389 = vunpack.c.h.b16 %v334
        %v390 = vunpack.c.l.b16 %v335
        %v391 = vunpack.c.h.b16 %v335
        %v392 = vunpack.c.l.b16 %v336
        %v393 = vunpack.c.h.b16 %v336
        %v394 = vunpack.c.l.b16 %v337
        %v395 = vunpack.c.h.b16 %v337
        %v396 = vunpack.c.l.b16 %v338
        %v397 = vunpack.c.h.b16 %v338
        %v398 = vunpack.c.l.b16 %v339
        %v399 = vunpack.c.h.b16 %v339
        %v400 = vpack.c.b16 %v370, %v368
        %v401 = vpack.c.b16 %v371, %v369
        %v402 = vpack.c.b16 %v374, %v372
        %v403 = vpack.c.b16 %v375, %v373
        %v404 = vpack.c.b16 %v378, %v376
        %v405 = vpack.c.b16 %v379, %v377
        %v406 = vpack.c.b16 %v382, %v380
        %v407 = vpack.c.b16 %v383, %v381
        %v408 = vpack.c.b16 %v386, %v384
        %v409 = vpack.c.b16 %v387, %v385
        %v410 = vpack.c.b16 %v390, %v388
        %v411 = vpack.c.b16 %v391, %v389
        %v412 = vpack.c.b16 %v394, %v392
        %v413 = vpack.c.b16 %v395, %v393
        %v414 = vpack.c.b16 %v398, %v396
        %v415 = vpack.c.b16 %v399, %v397
        %432 = vmatprep.subr.bf16.mxu0 %v401
        %433 = vmatpush1.bf16.msra.mxu0 %v400
        %434 = vmatprep.subr.bf16.mxu0 %v403
        %435 = vmatpush1.bf16.msra.mxu0 %v402
        %436 = vmatprep.subr.bf16.mxu0 %v405
        %437 = vmatpush1.bf16.msra.mxu0 %v404
        %438 = vmatprep.subr.bf16.mxu0 %v407
        %439 = vmatpush1.bf16.msra.mxu0 %v406
        %440 = vmatprep.subr.bf16.mxu0 %v409
        %441 = vmatpush1.bf16.msra.mxu0 %v408
        %442 = vmatprep.subr.bf16.mxu0 %v411
        %443 = vmatpush1.bf16.msra.mxu0 %v410
        %444 = vmatprep.subr.bf16.mxu0 %v413
        %445 = vmatpush1.bf16.msra.mxu0 %v412
        %446 = vmatprep.subr.bf16.mxu0 %v415
        %447 = vmatpush1.bf16.msra.mxu0 %v414
        %448 = vmatprep.subr.bf16.mxu0 0
        %449 = vmatpush1.bf16.msra.mxu0 0
        %450 = vmatprep.subr.bf16.mxu0 0
        %451 = vmatpush1.bf16.msra.mxu0 0
        %452 = vmatprep.subr.bf16.mxu0 0
        %453 = vmatpush1.bf16.msra.mxu0 0
        %454 = vmatprep.subr.bf16.mxu0 0
        %455 = vmatpush1.bf16.msra.mxu0 0
        %456 = vmatprep.subr.bf16.mxu0 0
        %457 = vmatpush1.bf16.msra.mxu0 0
        %458 = vmatprep.subr.bf16.mxu0 0
        %459 = vmatpush1.bf16.msra.mxu0 0
        %460 = vmatprep.subr.bf16.mxu0 0
        %461 = vmatpush1.bf16.msra.mxu0 0
        %462 = vmatprep.subr.bf16.mxu0 0
        %463 = vmatpush1.bf16.msra.mxu0 0
        %464 = vmatprep.mubr.bf16.mxu0 0
        %465 = vmatmul.mubr.bf16.gmra.mrb[0].mxu0 %v316
        %v466 = vpop.f32.mrb[0].mxu0
        %v467 = vadd.f32 %v345, %v466
        %v468 = vpop.f32.mrb[0].mxu0
        %v469 = vadd.f32 %v349, %v468
        %v470 = vpop.f32.mrb[0].mxu0
        %v471 = vadd.f32 %v345, %v470
        %v472 = vpop.f32.mrb[0].mxu0
        %v473 = vadd.f32 %v349, %v472
        %474 = vmatprep.mubr.bf16.mxu0 0
        %475 = vmatmul.mubr.bf16.gmra.mrb[0].mxu0 %v317
        %v476 = vpop.f32.mrb[0].mxu0
        %v477 = vadd.f32 %v345, %v476
        %v478 = vpop.f32.mrb[0].mxu0
        %v479 = vadd.f32 %v349, %v478
        %v480 = vpop.f32.mrb[0].mxu0
        %v481 = vadd.f32 %v345, %v480
        %v482 = vpop.f32.mrb[0].mxu0
        %v483 = vadd.f32 %v349, %v482
        %484 = vmatprep.mubr.bf16.mxu0 0
        %485 = vmatmul.mubr.bf16.gmra.mrb[0].mxu0 %v318
        %v486 = vpop.f32.mrb[0].mxu0
        %v487 = vadd.f32 %v345, %v486
        %v488 = vpop.f32.mrb[0].mxu0
        %v489 = vadd.f32 %v349, %v488
        %v490 = vpop.f32.mrb[0].mxu0
        %v491 = vadd.f32 %v345, %v490
        %v492 = vpop.f32.mrb[0].mxu0
        %v493 = vadd.f32 %v349, %v492
        %494 = vmatprep.mubr.bf16.mxu0 0
        %495 = vmatmul.mubr.bf16.gmra.mrb[0].mxu0 %v319
        %v496 = vpop.f32.mrb[0].mxu0
        %v497 = vadd.f32 %v345, %v496
        %v498 = vpop.f32.mrb[0].mxu0
        %v499 = vadd.f32 %v349, %v498
        %v500 = vpop.f32.mrb[0].mxu0
        %v501 = vadd.f32 %v345, %v500
        %v502 = vpop.f32.mrb[0].mxu0
        %v503 = vadd.f32 %v349, %v502
        %504 = vmatprep.mubr.bf16.mxu0 0
        %505 = vmatmul.mubr.bf16.gmra.mrb[0].mxu0 %v320
        %v506 = vpop.f32.mrb[0].mxu0
        %v507 = vadd.f32 %v345, %v506
        %v508 = vpop.f32.mrb[0].mxu0
        %v509 = vadd.f32 %v349, %v508
        %v510 = vpop.f32.mrb[0].mxu0
        %v511 = vadd.f32 %v345, %v510
        %v512 = vpop.f32.mrb[0].mxu0
        %v513 = vadd.f32 %v349, %v512
        %514 = vmatprep.mubr.bf16.mxu0 0
        %515 = vmatmul.mubr.bf16.gmra.mrb[0].mxu0 %v321
        %v516 = vpop.f32.mrb[0].mxu0
        %v517 = vadd.f32 %v345, %v516
        %v518 = vpop.f32.mrb[0].mxu0
        %v519 = vadd.f32 %v349, %v518
        %v520 = vpop.f32.mrb[0].mxu0
        %v521 = vadd.f32 %v345, %v520
        %v522 = vpop.f32.mrb[0].mxu0
        %v523 = vadd.f32 %v349, %v522
        %524 = vmatprep.mubr.bf16.mxu0 0
        %525 = vmatmul.mubr.bf16.gmra.mrb[0].mxu0 %v322
        %v526 = vpop.f32.mrb[0].mxu0
        %v527 = vadd.f32 %v345, %v526
        %v528 = vpop.f32.mrb[0].mxu0
        %v529 = vadd.f32 %v349, %v528
        %v530 = vpop.f32.mrb[0].mxu0
        %v531 = vadd.f32 %v345, %v530
        %v532 = vpop.f32.mrb[0].mxu0
        %v533 = vadd.f32 %v349, %v532
        %534 = vmatprep.mubr.bf16.mxu0 0
        %535 = vmatmul.mubr.bf16.gmra.mrb[0].mxu0 %v323
        %v536 = vpop.f32.mrb[0].mxu0
        %v537 = vadd.f32 %v345, %v536
        %v538 = vpop.f32.mrb[0].mxu0
        %v539 = vadd.f32 %v349, %v538
        %v540 = vpop.f32.mrb[0].mxu0
        %v541 = vadd.f32 %v345, %v540
        %v542 = vpop.f32.mrb[0].mxu0
        %v543 = vadd.f32 %v349, %v542
        %544 = vdwg.mxu0
        %v545 = vmax.f32 %v467, 0.0
        %v546 = vmax.f32 %v469, 0.0
        %v547 = vmax.f32 %v471, 0.0
        %v548 = vmax.f32 %v473, 0.0
        %v549 = vmax.f32 %v477, 0.0
        %v550 = vmax.f32 %v479, 0.0
        %v551 = vmax.f32 %v481, 0.0
        %v552 = vmax.f32 %v483, 0.0
        %v553 = vmax.f32 %v487, 0.0
        %v554 = vmax.f32 %v489, 0.0
        %v555 = vmax.f32 %v491, 0.0
        %v556 = vmax.f32 %v493, 0.0
        %v557 = vmax.f32 %v497, 0.0
        %v558 = vmax.f32 %v499, 0.0
        %v559 = vmax.f32 %v501, 0.0
        %v560 = vmax.f32 %v503, 0.0
        %v561 = vmax.f32 %v507, 0.0
        %v562 = vmax.f32 %v509, 0.0
        %v563 = vmax.f32 %v511, 0.0
        %v564 = vmax.f32 %v513, 0.0
        %v565 = vmax.f32 %v517, 0.0
        %v566 = vmax.f32 %v519, 0.0
        %v567 = vmax.f32 %v521, 0.0
        %v568 = vmax.f32 %v523, 0.0
        %v569 = vmax.f32 %v527, 0.0
        %v570 = vmax.f32 %v529, 0.0
        %v571 = vmax.f32 %v531, 0.0
        %v572 = vmax.f32 %v533, 0.0
        %v573 = vmax.f32 %v537, 0.0
        %v574 = vmax.f32 %v539, 0.0
        %v575 = vmax.f32 %v541, 0.0
        %v576 = vmax.f32 %v543, 0.0
        %v577 = vpack.c.bf16 %v547, %v545
        %v578 = vpack.c.bf16 %v548, %v546
        %v579 = vpack.c.bf16 %v551, %v549
        %v580 = vpack.c.bf16 %v552, %v550
        %v581 = vpack.c.bf16 %v555, %v553
        %v582 = vpack.c.bf16 %v556, %v554
        %v583 = vpack.c.bf16 %v559, %v557
        %v584 = vpack.c.bf16 %v560, %v558
        %v585 = vpack.c.bf16 %v563, %v561
        %v586 = vpack.c.bf16 %v564, %v562
        %v587 = vpack.c.bf16 %v567, %v565
        %v588 = vpack.c.bf16 %v568, %v566
        %v589 = vpack.c.bf16 %v571, %v569
        %v590 = vpack.c.bf16 %v572, %v570
        %v591 = vpack.c.bf16 %v575, %v573
        %v592 = vpack.c.bf16 %v576, %v574
        %v593 = vld [vmem:[#allocation8] sm:$0xf]
        %v594 = vld [vmem:[#allocation8 + $0x4] sm:$0xf]
        %v595 = vld [vmem:[#allocation8 + $0x8] sm:$0xf]
        %v596 = vld [vmem:[#allocation8 + $0xc] sm:$0xf]
        %v597 = vld [vmem:[#allocation8 + $0x10] sm:$0xf]
        %v598 = vld [vmem:[#allocation8 + $0x14] sm:$0xf]
        %v599 = vld [vmem:[#allocation8 + $0x18] sm:$0xf]
        %v600 = vld [vmem:[#allocation8 + $0x1c] sm:$0xf]
        %v601 = vld [vmem:[#allocation8 + $0x20] sm:$0xf]
        %v602 = vld [vmem:[#allocation8 + $0x24] sm:$0xf]
        %v603 = vld [vmem:[#allocation8 + $0x28] sm:$0xf]
        %v604 = vld [vmem:[#allocation8 + $0x2c] sm:$0xf]
        %v605 = vld [vmem:[#allocation8 + $0x30] sm:$0xf]
        %v606 = vld [vmem:[#allocation8 + $0x34] sm:$0xf]
        %v607 = vld [vmem:[#allocation8 + $0x38] sm:$0xf]
        %v608 = vld [vmem:[#allocation8 + $0x3c] sm:$0xf]
        %v609 = vld [vmem:[#allocation8 + $0x40] sm:$0xf]
        %v610 = vld [vmem:[#allocation8 + $0x44] sm:$0xf]
        %v611 = vld [vmem:[#allocation8 + $0x48] sm:$0xf]
        %v612 = vld [vmem:[#allocation8 + $0x4c] sm:$0xf]
        %v613 = vld [vmem:[#allocation8 + $0x50] sm:$0xf]
        %v614 = vld [vmem:[#allocation8 + $0x54] sm:$0xf]
        %v615 = vld [vmem:[#allocation8 + $0x58] sm:$0xf]
        %v616 = vld [vmem:[#allocation8 + $0x5c] sm:$0xf]
        %v617 = vld [vmem:[#allocation8 + $0x60] sm:$0xf]
        %v618 = vld [vmem:[#allocation8 + $0x64] sm:$0xf]
        %v619 = vld [vmem:[#allocation8 + $0x68] sm:$0xf]
        %v620 = vld [vmem:[#allocation8 + $0x6c] sm:$0xf]
        %v621 = vld [vmem:[#allocation8 + $0x70] sm:$0xf]
        %v622 = vld [vmem:[#allocation8 + $0x74] sm:$0xf]
        %v623 = vld [vmem:[#allocation8 + $0x78] sm:$0xf]
        %v624 = vld [vmem:[#allocation8 + $0x7c] sm:$0xf]
        %v625 = vld [vmem:[#allocation10] sm:$0x1]
        %v627 = vlaneseq
        %v628 = vshrl.u32 %v627, 7
        %v629 = vsub.s32 0, %v628
        %v630 = vrot.slane %v625, %v629
        %v664 = vunpack.c.l.b16 %v593
        %v665 = vunpack.c.l.b16 %v594
        %v666 = vunpack.c.l.b16 %v595
        %v667 = vunpack.c.l.b16 %v596
        %v668 = vunpack.c.l.b16 %v597
        %v669 = vunpack.c.l.b16 %v598
        %v670 = vunpack.c.l.b16 %v599
        %v671 = vunpack.c.l.b16 %v600
        %v672 = vunpack.c.l.b16 %v601
        %v673 = vunpack.c.l.b16 %v602
        %v674 = vunpack.c.l.b16 %v603
        %v675 = vunpack.c.l.b16 %v604
        %v676 = vunpack.c.l.b16 %v605
        %v677 = vunpack.c.l.b16 %v606
        %v678 = vunpack.c.l.b16 %v607
        %v679 = vunpack.c.l.b16 %v608
        %v680 = vunpack.c.l.b16 %v609
        %v681 = vunpack.c.l.b16 %v610
        %v682 = vunpack.c.l.b16 %v611
        %v683 = vunpack.c.l.b16 %v612
        %v684 = vunpack.c.l.b16 %v613
        %v685 = vunpack.c.l.b16 %v614
        %v686 = vunpack.c.l.b16 %v615
        %v687 = vunpack.c.l.b16 %v616
        %v688 = vunpack.c.l.b16 %v617
        %v689 = vunpack.c.l.b16 %v618
        %v690 = vunpack.c.l.b16 %v619
        %v691 = vunpack.c.l.b16 %v620
        %v692 = vunpack.c.l.b16 %v621
        %v693 = vunpack.c.l.b16 %v622
        %v694 = vunpack.c.l.b16 %v623
        %v695 = vunpack.c.l.b16 %v624
        %v696 = vpack.c.b16 %v665, %v664
        %v697 = vpack.c.b16 %v667, %v666
        %v698 = vpack.c.b16 %v669, %v668
        %v699 = vpack.c.b16 %v671, %v670
        %v700 = vpack.c.b16 %v673, %v672
        %v701 = vpack.c.b16 %v675, %v674
        %v702 = vpack.c.b16 %v677, %v676
        %v703 = vpack.c.b16 %v679, %v678
        %v704 = vpack.c.b16 %v681, %v680
        %v705 = vpack.c.b16 %v683, %v682
        %v706 = vpack.c.b16 %v685, %v684
        %v707 = vpack.c.b16 %v687, %v686
        %v708 = vpack.c.b16 %v689, %v688
        %v709 = vpack.c.b16 %v691, %v690
        %v710 = vpack.c.b16 %v693, %v692
        %v711 = vpack.c.b16 %v695, %v694
        %728 = vmatprep.subr.bf16.mxu0 0
        %729 = vmatpush1.bf16.msra.mxu0 %v696
        %730 = vmatprep.subr.bf16.mxu0 0
        %731 = vmatpush1.bf16.msra.mxu0 %v697
        %732 = vmatprep.subr.bf16.mxu0 0
        %733 = vmatpush1.bf16.msra.mxu0 %v698
        %734 = vmatprep.subr.bf16.mxu0 0
        %735 = vmatpush1.bf16.msra.mxu0 %v699
        %736 = vmatprep.subr.bf16.mxu0 0
        %737 = vmatpush1.bf16.msra.mxu0 %v700
        %738 = vmatprep.subr.bf16.mxu0 0
        %739 = vmatpush1.bf16.msra.mxu0 %v701
        %740 = vmatprep.subr.bf16.mxu0 0
        %741 = vmatpush1.bf16.msra.mxu0 %v702
        %742 = vmatprep.subr.bf16.mxu0 0
        %743 = vmatpush1.bf16.msra.mxu0 %v703
        %744 = vmatprep.subr.bf16.mxu0 0
        %745 = vmatpush1.bf16.msra.mxu0 %v704
        %746 = vmatprep.subr.bf16.mxu0 0
        %747 = vmatpush1.bf16.msra.mxu0 %v705
        %748 = vmatprep.subr.bf16.mxu0 0
        %749 = vmatpush1.bf16.msra.mxu0 %v706
        %750 = vmatprep.subr.bf16.mxu0 0
        %751 = vmatpush1.bf16.msra.mxu0 %v707
        %752 = vmatprep.subr.bf16.mxu0 0
        %753 = vmatpush1.bf16.msra.mxu0 %v708
        %754 = vmatprep.subr.bf16.mxu0 0
        %755 = vmatpush1.bf16.msra.mxu0 %v709
        %756 = vmatprep.subr.bf16.mxu0 0
        %757 = vmatpush1.bf16.msra.mxu0 %v710
        %758 = vmatprep.subr.bf16.mxu0 0
        %759 = vmatpush1.bf16.msra.mxu0 %v711
        %760 = vmatprep.mubr.bf16.mxu0 %v578
        %761 = vmatmul.mubr.bf16.gmra.mrb[0].mxu0 %v577
        %v762 = vpop.f32.mrb[0].mxu0
        %v763 = vadd.f32 %v630, %v762
        %v764 = vpop.f32.mrb[0].mxu0
        %v765 = vpop.f32.mrb[0].mxu0
        %v766 = vadd.f32 %v630, %v765
        %v767 = vpop.f32.mrb[0].mxu0
        %768 = vmatprep.mubr.bf16.mxu0 %v580
        %769 = vmatmul.mubr.bf16.gmra.mrb[0].mxu0 %v579
        %v770 = vpop.f32.mrb[0].mxu0
        %v771 = vadd.f32 %v630, %v770
        %v772 = vpop.f32.mrb[0].mxu0
        %v773 = vpop.f32.mrb[0].mxu0
        %v774 = vadd.f32 %v630, %v773
        %v775 = vpop.f32.mrb[0].mxu0
        %776 = vmatprep.mubr.bf16.mxu0 %v582
        %777 = vmatmul.mubr.bf16.gmra.mrb[0].mxu0 %v581
        %v778 = vpop.f32.mrb[0].mxu0
        %v779 = vadd.f32 %v630, %v778
        %v780 = vpop.f32.mrb[0].mxu0
        %v781 = vpop.f32.mrb[0].mxu0
        %v782 = vadd.f32 %v630, %v781
        %v783 = vpop.f32.mrb[0].mxu0
        %784 = vmatprep.mubr.bf16.mxu0 %v584
        %785 = vmatmul.mubr.bf16.gmra.mrb[0].mxu0 %v583
        %v786 = vpop.f32.mrb[0].mxu0
        %v787 = vadd.f32 %v630, %v786
        %v788 = vpop.f32.mrb[0].mxu0
        %v789 = vpop.f32.mrb[0].mxu0
        %v790 = vadd.f32 %v630, %v789
        %v791 = vpop.f32.mrb[0].mxu0
        %792 = vmatprep.mubr.bf16.mxu0 %v586
        %793 = vmatmul.mubr.bf16.gmra.mrb[0].mxu0 %v585
        %v794 = vpop.f32.mrb[0].mxu0
        %v795 = vadd.f32 %v630, %v794
        %v796 = vpop.f32.mrb[0].mxu0
        %v797 = vpop.f32.mrb[0].mxu0
        %v798 = vadd.f32 %v630, %v797
        %v799 = vpop.f32.mrb[0].mxu0
        %800 = vmatprep.mubr.bf16.mxu0 %v588
        %801 = vmatmul.mubr.bf16.gmra.mrb[0].mxu0 %v587
        %v802 = vpop.f32.mrb[0].mxu0
        %v803 = vadd.f32 %v630, %v802
        %v804 = vpop.f32.mrb[0].mxu0
        %v805 = vpop.f32.mrb[0].mxu0
        %v806 = vadd.f32 %v630, %v805
        %v807 = vpop.f32.mrb[0].mxu0
        %808 = vmatprep.mubr.bf16.mxu0 %v590
        %809 = vmatmul.mubr.bf16.gmra.mrb[0].mxu0 %v589
        %v810 = vpop.f32.mrb[0].mxu0
        %v811 = vadd.f32 %v630, %v810
        %v812 = vpop.f32.mrb[0].mxu0
        %v813 = vpop.f32.mrb[0].mxu0
        %v814 = vadd.f32 %v630, %v813
        %v815 = vpop.f32.mrb[0].mxu0
        %816 = vmatprep.mubr.bf16.mxu0 %v592
        %817 = vmatmul.mubr.bf16.gmra.mrb[0].mxu0 %v591
        %v818 = vpop.f32.mrb[0].mxu0
        %v819 = vadd.f32 %v630, %v818
        %v820 = vpop.f32.mrb[0].mxu0
        %v821 = vpop.f32.mrb[0].mxu0
        %v822 = vadd.f32 %v630, %v821
        %v823 = vpop.f32.mrb[0].mxu0
        %824 = vdwg.mxu0
        %v825 = vtanh.pop %v763
        %v826 = vtanh.pop %v766
        %v827 = vtanh.pop %v771
        %v828 = vtanh.pop %v774
        %v829 = vtanh.pop %v779
        %v830 = vtanh.pop %v782
        %v831 = vtanh.pop %v787
        %v832 = vtanh.pop %v790
        %v833 = vtanh.pop %v795
        %v834 = vtanh.pop %v798
        %v835 = vtanh.pop %v803
        %v836 = vtanh.pop %v806
        %v837 = vtanh.pop %v811
        %v838 = vtanh.pop %v814
        %v839 = vtanh.pop %v819
        %v840 = vtanh.pop %v822
        %841 = vst [vmem:[%s296] sm:$0xff] %v825
        %842 = vst [vmem:[%s296 + $0x8] sm:$0xff] %v826
        %843 = vst [vmem:[%s296 + $0x10] sm:$0xff] %v827
        %844 = vst [vmem:[%s296 + $0x18] sm:$0xff] %v828
        %845 = vst [vmem:[%s296 + $0x20] sm:$0xff] %v829
        %846 = vst [vmem:[%s296 + $0x28] sm:$0xff] %v830
        %847 = vst [vmem:[%s296 + $0x30] sm:$0xff] %v831
        %848 = vst [vmem:[%s296 + $0x38] sm:$0xff] %v832
        %849 = vst [vmem:[%s296 + $0x40] sm:$0xff] %v833
        %850 = vst [vmem:[%s296 + $0x48] sm:$0xff] %v834
        %851 = vst [vmem:[%s296 + $0x50] sm:$0xff] %v835
        %852 = vst [vmem:[%s296 + $0x58] sm:$0xff] %v836
        %853 = vst [vmem:[%s296 + $0x60] sm:$0xff] %v837
        %854 = vst [vmem:[%s296 + $0x68] sm:$0xff] %v838
        %855 = vst [vmem:[%s296 + $0x70] sm:$0xff] %v839
        %856 = vst [vmem:[%s296 + $0x78] sm:$0xff] %v840
        %s857 = sand.u32 %s142, 1
        %s858 = scalar_lea.sflag [#allocation4], %s857
        %s859 = sand.u32 %s142, 1
        %s860 = smul.addr %s859, 128
        %s861 = scalar_lea.vmem [#allocation11], %s860
        // Predicated region
        $region61: #{tpu_custom_call.1} parent=39 // pred_check
          %p862 = pneg %p152
        $region62: #{tpu_custom_call.1} parent=39 // pred_check_branch
          %864 = sbr.rel (%p862) target = $region64
        $region63: #{tpu_custom_call.1} parent=39 // pred_region
          %s865 = smul.u32 16, %s24
          %s867 = ssub.s32 2048, 2048
          %868 = vsyncadd %s858, %s867
          %s869 = smul.addr %s865, 128
          %s870 = scalar_lea.hbm %s5, %s869
          %s871 = sshll.u32 %s861, 4
          %s872 = int_to_ptr.vmem [resolvable:$true] %s871
          %877 = dma.vmem_to_hbm [thread:$0]  %s872, 2048, %s870, %s858, 128, 128, 8
        $region64: #{tpu_custom_call.1} parent=39 // pred_fallthru
          _
      $region40: #{tpu_custom_call.1} parent=5 // pred_fallthru
        _
      %p878 = scmp.le.s32.totalorder 2, %s19
      // Predicated region
      $region65: #{tpu_custom_call.1} parent=5 // pred_check
        %p879 = pneg %p878
      $region66: #{tpu_custom_call.1} parent=5 // pred_check_branch
        %881 = sbr.rel (%p879) target = $region68
      $region67: #{tpu_custom_call.1} parent=5 // pred_region
        %s882 = ssub.s32 %s19, 2
        // Predicated region
        $region69: #{tpu_custom_call.1} parent=67 // pred_check
          %p883 = pneg %p158
        $region70: #{tpu_custom_call.1} parent=67 // pred_check_branch
          %885 = sbr.rel (%p883) target = $region72
        $region71: #{tpu_custom_call.1} parent=67 // pred_region
          %s886 = sand.u32 %s143, 1
          %s887 = scalar_lea.sflag [#allocation4], %s886
          %s888 = sand.u32 %s143, 1
          %s889 = smul.addr %s888, 128
          %s890 = scalar_lea.vmem [#allocation11], %s889
          %891 = dma.done %s887, 2048
        $region72: #{tpu_custom_call.1} parent=67 // pred_fallthru
          _
      $region68: #{tpu_custom_call.1} parent=5 // pred_fallthru
        _
    $region6: #{tpu_custom_call.1} parent=1 // loop_footer
      %s23 = sadd.s32 1, %s19
    $region7: #{tpu_custom_call.1} parent=1 // loop_footer_branch
      %18 = sbr.rel target = $region3
    $region8: #{tpu_custom_call.1} parent=1 // loop_exit
      _
    %892 = vsyncpa [#allocation3], 1
    %s893 = scalar_lea.sflag [#allocation3], 1
    %894 = vsyncpa %s893, 1
    %895 = vsyncpa [#allocation6], 1
    %896 = vsyncpa [#allocation9], 1
    %897 = vsyncpa [#allocation4], 1
    %s898 = scalar_lea.sflag [#allocation4], 1
    %899 = vsyncpa %s898, 1

</llo_original>
